<compile_context>
chip_gen: v7x
topology: tpu7x:2x2x1
jax: 0.10.0
libtpu: 0.0.40
codegen_flags: <defaults>
</compile_context>

<pallas_src>
import jax
import jax.numpy as jnp
from jax.experimental import pallas as pl
from jax.experimental.pallas import tpu as pltpu


def _rup(x, m):
    return ((x + m - 1) // m) * m


def _pad_to(x, shape):
    return jnp.pad(x, [(0, s - d) for d, s in zip(x.shape, shape)])


# ---------------------------------------------------------------------------
# Phase 1: time-blocked LSTM recurrence
# ---------------------------------------------------------------------------
def lstm_recurrence_kernel(emb_ref, c0_ref, wih_ref, whh_ref, blstm_ref, len_ref,
                           hseq_ref, hn_ref, cn_ref,
                           h_scr, c_scr, gx_scr):
    """One grid step processes `tb` time steps.

    emb_ref   (tb, Bp, Ep) bf16   time-major embedded captions for this block
    c0_ref    (Bp, Hp) f32        initial cell state (= linear_features(features))
    wih_ref   (Ep, 4Hp) bf16, whh_ref (Hp, 4Hp) bf16, blstm_ref (1, 4Hp) f32
              LSTM weights, gate order (i, f, o, g), per-gate lane-padded
    len_ref   (Bp, 1) int32       caption lengths
    hseq_ref  (tb, Bp, Hp) bf16   masked hidden states (pipelined out per block)
    hn_ref/cn_ref (Bp, Hp) f32    final LSTM state (written at last block)
    h_scr/c_scr (Bp, Hp) f32      persistent recurrent state
    gx_scr    (tb*Bp, 4Hp) f32    per-block precomputed input projection
    """
    tb, Bp, Ep = emb_ref.shape
    Hp = h_scr.shape[-1]
    blk = pl.program_id(0)

    # init_hidden(): h0 = zeros, c0 = linear_features(features) (hoisted to XLA).
    @pl.when(blk == 0)
    def _():
        h_scr[...] = jnp.zeros_like(h_scr)
        c_scr[...] = c0_ref[...]

    # Hoisted input projection: ONE (tb*Bp, Ep) x (Ep, 4Hp) MXU matmul per block.
    x_block = emb_ref[...].reshape(tb * Bp, Ep)                    # bf16
    gx_scr[...] = (jnp.dot(x_block, wih_ref[...],
                           preferred_element_type=jnp.float32) + blstm_ref[...])

    # Hoisted loads — keep them out of the serial loop.
    lengths = len_ref[...]          # (Bp, 1) int32
    whh = whh_ref[...]              # (Hp, 4Hp) bf16

    def step(t_local, carry):
        t = blk * tb + t_local
        h_prev = h_scr[...]
        c_prev = c_scr[...]

        off = pl.multiple_of(t_local * Bp, 8)
        gates = gx_scr[pl.ds(off, Bp), :] + jnp.dot(
            h_prev.astype(jnp.bfloat16), whh,
            preferred_element_type=jnp.float32)                    # (Bp, 4Hp) f32

        # Gate order (i, f, o, g): one sigmoid for 3 gates, one tanh for g.
        sig = jax.nn.sigmoid(gates[:, :3 * Hp])
        i_g = sig[:, 0 * Hp:1 * Hp]
        f_g = sig[:, 1 * Hp:2 * Hp]
        o_g = sig[:, 2 * Hp:3 * Hp]
        g_g = jnp.tanh(gates[:, 3 * Hp:4 * Hp])

        c_new = f_g * c_prev + i_g * g_g
        h_new = o_g * jnp.tanh(c_new)

        mask = t < lengths                     # (Bp, 1) packed-sequence semantics
        h_scr[...] = jnp.where(mask, h_new, h_prev)
        c_scr[...] = jnp.where(mask, c_new, c_prev)

        # pad_packed_sequence zero-pads past each length (linear applied later).
        hseq_ref[t_local] = jnp.where(mask, h_new, 0.0).astype(hseq_ref.dtype)
        return carry

    jax.lax.fori_loop(0, tb, step, 0, unroll=True)

    @pl.when(blk == pl.num_programs(0) - 1)
    def _():
        hn_ref[...] = h_scr[...]
        cn_ref[...] = c_scr[...]


# ---------------------------------------------------------------------------
# Phase 2: batched output projection (Mp, H) x (H, V), batch-major rows
# ---------------------------------------------------------------------------
def output_proj_kernel(h_ref, w_ref, b_ref, o_ref):
    o_ref[...] = (jnp.dot(h_ref[...], w_ref[...],
                          preferred_element_type=jnp.float32) + b_ref[...])


# ---------------------------------------------------------------------------
# Wrapper
# ---------------------------------------------------------------------------
@jax.jit
def decoder_forward(params, features, captions, lengths):
    """features: (B, P, Enc) f32; captions: (B, T) int32; lengths: (B,) int32."""
    B, P, Enc = features.shape
    T = captions.shape[1]
    V_emb, E = params["embedding"].shape
    H = params["wf"].shape[1]
    V = params["wout"].shape[1]

    # Hardware-tile padding.
    Bp = _rup(B, 8)
    Ep = _rup(E, 128)
    Hp = _rup(H, 128)
    Vp = _rup(V, 128)

    # Time-block size: as large as possible (<= 32) with small time padding.
    if T <= 32:
        tb = _rup(T, 8)
    else:
        tb = min((32, 24, 16), key=lambda c: (_rup(T, c) - T, -c))
    Tp = _rup(T, tb)

    # Embedding gather directly into padded TIME-MAJOR layout, bf16 MXU operand.
    emb_tab = _pad_to(params["embedding"].astype(jnp.bfloat16), (V_emb, Ep))
    cap_tm = jnp.zeros((Tp, Bp), jnp.int32).at[:T, :B].set(
        captions.astype(jnp.int32).T)
    emb_tm = jnp.take(emb_tab, cap_tm, axis=0)                    # (Tp, Bp, Ep) bf16

    # c0 = linear_features(features): hoisted out of the recurrence kernel (tiny
    # one-off matmul; keeps W_f out of VMEM for the whole time grid).
    c0 = (features.reshape(B, -1).astype(jnp.float32) @ params["wf"].astype(jnp.float32)
          + params["bf"].astype(jnp.float32))
    c0 = _pad_to(c0, (Bp, Hp))                                     # (Bp, Hp) f32

    # Pad LSTM weights PER GATE so each gate occupies a lane-aligned Hp column slab,
    # reordering gates (i,f,g,o) -> (i,f,o,g) so sigmoids are contiguous.
    gate_perm = (0, 1, 3, 2)

    def pad_gates(w, lead, lead_p, dtype):
        w4 = w.astype(jnp.float32).reshape(lead, 4, H)[:, gate_perm, :]
        w4 = jnp.pad(w4, ((0, lead_p - lead), (0, 0), (0, Hp - H)))
        return w4.reshape(lead_p, 4 * Hp).astype(dtype)

    wih = pad_gates(params["wih"], E, Ep, jnp.bfloat16)
    whh = pad_gates(params["whh"], H, Hp, jnp.bfloat16)
    blstm = pad_gates(params["blstm"], 1, 1, jnp.float32)

    wout = _pad_to(params["wout"].astype(jnp.bfloat16), (Hp, Vp))
    bout = _pad_to(params["bout"].astype(jnp.float32), (1, Vp))

    lens = jnp.zeros((Bp, 1), jnp.int32).at[:B, 0].set(lengths.astype(jnp.int32))

    # ---- Phase 1: recurrence, grid over time blocks -------------------------
    grid_t = Tp // tb
    const1 = pl.Buffered(1)   # constant-index operands: single VMEM copy

    p1_vmem = int(
        2 * tb * Bp * Ep * 2          # emb block, double-buffered, bf16
        + Bp * Hp * 4                 # c0
        + Ep * 4 * Hp * 2             # wih (bf16, single-buffered)
        + Hp * 4 * Hp * 2             # whh
        + 8 * 4 * Hp * 4 + 8 * 128 * 4  # blstm / lengths tiles
        + 2 * tb * Bp * Hp * 2        # hseq block, double-buffered, bf16
        + 4 * Bp * Hp * 4             # hn / cn output blocks
        + 2 * Bp * Hp * 4             # h / c scratch
        + tb * Bp * 4 * Hp * 4)       # gx scratch
    p1_limit = min(max(int(1.3 * p1_vmem) + (2 << 20), 16 << 20), 64 << 20)

    p1_cost = pl.CostEstimate(
        flops=int(2 * Tp * Bp * 4 * Hp * (Ep + Hp)),
        transcendentals=int(5 * Tp * Bp * Hp),
        bytes_accessed=int(Tp * Bp * Ep * 2 + Tp * Bp * Hp * 2
                           + (Ep + Hp) * 4 * Hp * 2 + 3 * Bp * Hp * 4))

    hseq, hn, cn = pl.pallas_call(
        lstm_recurrence_kernel,
        out_shape=(jax.ShapeDtypeStruct((Tp, Bp, Hp), jnp.bfloat16),
                   jax.ShapeDtypeStruct((Bp, Hp), jnp.float32),
                   jax.ShapeDtypeStruct((Bp, Hp), jnp.float32)),
        grid=(grid_t,),
        in_specs=[
            pl.BlockSpec((tb, Bp, Ep), lambda i: (i, 0, 0)),                        # emb
            pl.BlockSpec((Bp, Hp), lambda i: (0, 0), pipeline_mode=const1),         # c0
            pl.BlockSpec((Ep, 4 * Hp), lambda i: (0, 0), pipeline_mode=const1),     # wih
            pl.BlockSpec((Hp, 4 * Hp), lambda i: (0, 0), pipeline_mode=const1),     # whh
            pl.BlockSpec((1, 4 * Hp), lambda i: (0, 0), pipeline_mode=const1),      # blstm
            pl.BlockSpec((Bp, 1), lambda i: (0, 0), pipeline_mode=const1),          # lengths
        ],
        out_specs=(
            pl.BlockSpec((tb, Bp, Hp), lambda i: (i, 0, 0)),   # hidden seq (pipelined)
            pl.BlockSpec((Bp, Hp), lambda i: (0, 0)),          # h_n (resident)
            pl.BlockSpec((Bp, Hp), lambda i: (0, 0)),          # c_n (resident)
        ),
        scratch_shapes=[pltpu.VMEM((Bp, Hp), jnp.float32),            # h state
                        pltpu.VMEM((Bp, Hp), jnp.float32),            # c state
                        pltpu.VMEM((tb * Bp, 4 * Hp), jnp.float32)],  # gates_x block
        compiler_params=pltpu.CompilerParams(
            dimension_semantics=("arbitrary",),
            vmem_limit_bytes=p1_limit),
        cost_estimate=p1_cost,
    )(emb_tm, c0, wih, whh, blstm, lens)

    # ---- Phase 2: batched output projection ---------------------------------
    # Transpose only the small bf16 hidden sequence (not the big logits tensor)
    # so the projection emits batch-major logits directly.
    M = Tp * Bp
    tm = next((c for c in (512, 384, 256, 128, 64) if M % c == 0), 256)
    Mp = _rup(M, tm)
    tv = next(c for c in (512, 256, 128) if Vp % c == 0)

    h_bm = jnp.transpose(hseq, (1, 0, 2)).reshape(M, Hp)           # (Bp*Tp, Hp) bf16
    h_bm = _pad_to(h_bm, (Mp, Hp))

    p2_vmem = int(2 * (tm * Hp * 2 + Hp * tv * 2 + 8 * tv * 4 + tm * tv * 4))
    p2_limit = min(max(int(1.3 * p2_vmem) + (2 << 20), 16 << 20), 64 << 20)
    p2_cost = pl.CostEstimate(
        flops=int(2 * Mp * Hp * Vp),
        transcendentals=0,
        bytes_accessed=int(Mp * Hp * 2 + Hp * Vp * 2 + Mp * Vp * 4))

    # Grid: vocab tiles OUTER, row tiles INNER -> the (Hp, tv) W_out tile stays
    # resident across the inner row sweep; only the small h tile streams.
    logits_flat = pl.pallas_call(
        output_proj_kernel,
        out_shape=jax.ShapeDtypeStruct((Mp, Vp), jnp.float32),
        grid=(Vp // tv, Mp // tm),
        in_specs=[pl.BlockSpec((tm, Hp), lambda j, i: (i, 0)),
                  pl.BlockSpec((Hp, tv), lambda j, i: (0, j)),
                  pl.BlockSpec((1, tv), lambda j, i: (0, j))],
        out_specs=pl.BlockSpec((tm, tv), lambda j, i: (i, j)),
        compiler_params=pltpu.CompilerParams(
            dimension_semantics=("parallel", "parallel"),
            vmem_limit_bytes=p2_limit),
        cost_estimate=p2_cost,
    )(h_bm, wout, bout)

    logits = logits_flat[:M].reshape(Bp, Tp, Vp)[:B, :T, :V]       # (B, T, V)
    state = (hn[None, :B, :H], cn[None, :B, :H])                   # (1, B, H) like nn.LSTM
    return logits, state


# ---------------------------------------------------------------------------
# Parameters + pure-JAX reference
# ---------------------------------------------------------------------------
def make_params(key, embed_size, vocab_size, encoder_size, num_pixels, hidden_size):
    ks = jax.random.split(key, 8)
    s = 0.1
    pe = encoder_size * num_pixels
    return {
        "embedding": s * jax.random.normal(ks[0], (vocab_size, embed_size), jnp.float32),
        "wf":   s * jax.random.normal(ks[1], (pe, hidden_size), jnp.float32),
        "bf":   s * jax.random.normal(ks[2], (1, hidden_size), jnp.float32),
        # LSTM: combined weights, gate order (i, f, g, o); blstm = b_ih + b_hh
        "wih":  s * jax.random.normal(ks[3], (embed_size, 4 * hidden_size), jnp.float32),
        "whh":  s * jax.random.normal(ks[4], (hidden_size, 4 * hidden_size), jnp.float32),
        "blstm": s * jax.random.normal(ks[5], (1, 4 * hidden_size), jnp.float32),
        "wout": s * jax.random.normal(ks[6], (hidden_size, vocab_size), jnp.float32),
        "bout": s * jax.random.normal(ks[7], (1, vocab_size), jnp.float32),
    }


def reference_forward(params, features, captions, lengths):
    """Pure-JAX f32 reference mirroring the PyTorch forward (for sanity check)."""
    B, P, Enc = features.shape
    T = captions.shape[1]
    H = params["wf"].shape[1]
    emb = jnp.take(params["embedding"], captions, axis=0)       # (B, T, E)
    c = features.reshape(B, -1) @ params["wf"] + params["bf"]
    h = jnp.zeros((B, H), jnp.float32)
    outs = []
    for t in range(T):
        x = emb[:, t, :]
        gates = x @ params["wih"] + h @ params["whh"] + params["blstm"]
        i_g = jax.nn.sigmoid(gates[:, 0 * H:1 * H])
        f_g = jax.nn.sigmoid(gates[:, 1 * H:2 * H])
        g_g = jnp.tanh(gates[:, 2 * H:3 * H])
        o_g = jax.nn.sigmoid(gates[:, 3 * H:4 * H])
        c_new = f_g * c + i_g * g_g
        h_new = o_g * jnp.tanh(c_new)
        mask = (t < lengths)[:, None]
        h = jnp.where(mask, h_new, h)
        c = jnp.where(mask, c_new, c)
        outs.append(jnp.where(mask, h_new, jnp.zeros_like(h_new)))
    hidden_seq = jnp.stack(outs, axis=1)                        # (B, T, H)
    logits = hidden_seq @ params["wout"] + params["bout"]
    return logits, (h[None], c[None])


if __name__ == "__main__":
    # Small shapes implied by the module's forward():
    B, T = 2, 8                 # batch, max caption length
    E = 32                      # embed_size
    V = 64                      # vocab_size
    Enc, P = 8, 4               # encoder_size, num_pixels  -> P*Enc = 32
    H = 32                      # hidden_size

    key = jax.random.PRNGKey(0)
    kp, kf, kc = jax.random.split(key, 3)

    params = make_params(kp, E, V, Enc, P, H)
    features = jax.random.normal(kf, (B, P, Enc), jnp.float32)
    captions = jax.random.randint(kc, (B, T), 0, V, dtype=jnp.int32)
    lengths = jnp.array([T, 5], dtype=jnp.int32)   # sorted descending, max == T

    (logits, (hn, cn)) = decoder_forward(params, features, captions, lengths)
    jax.block_until_ready((logits, hn, cn))

    ref_logits, (ref_hn, ref_cn) = reference_forward(params, features, captions, lengths)
    assert logits.shape == (B, T, V) and hn.shape == (1, B, H) and cn.shape == (1, B, H)
    # Tolerance accounts for bf16 MXU operands (f32 accumulation & f32 state).
    assert jnp.allclose(logits, ref_logits, atol=1e-2, rtol=1e-2)
    assert jnp.allclose(hn, ref_hn, atol=1e-2, rtol=1e-2)
    assert jnp.allclose(cn, ref_cn, atol=1e-2, rtol=1e-2)

    print("KERNEL_OK")
</pallas_src>

<mosaic_0001>
module attributes {stable_mosaic.version = 11 : i64} {
  func.func @lstm_recurrence_kernel(%arg0: i32, %arg1: memref<8x8x128xbf16, #tpu.memory_space<vmem>>, %arg2: memref<8x128xf32, #tpu.memory_space<vmem>>, %arg3: memref<128x512xbf16, #tpu.memory_space<vmem>>, %arg4: memref<128x512xbf16, #tpu.memory_space<vmem>>, %arg5: memref<1x512xf32, #tpu.memory_space<vmem>>, %arg6: memref<8x1xi32, #tpu.memory_space<vmem>>, %arg7: memref<8x8x128xbf16, #tpu.memory_space<vmem>>, %arg8: memref<8x128xf32, #tpu.memory_space<vmem>>, %arg9: memref<8x128xf32, #tpu.memory_space<vmem>>, %arg10: memref<8x128xf32, #tpu.memory_space<vmem>>, %arg11: memref<8x128xf32, #tpu.memory_space<vmem>>, %arg12: memref<64x512xf32, #tpu.memory_space<vmem>>) attributes {dimension_semantics = [#tpu.dimension_semantics<arbitrary>], iteration_bounds = array<i64: 1>, scalar_prefetch = 0 : i64, scratch_operands = 3 : i64, tpu.core_type = #tpu.core_type<tc>, window_params = [{transform_indices = @transform_0, window_bounds = array<i64: 8, 8, 128>}, {pipeline_mode = #tpu.pipeline_mode<synchronous>, transform_indices = @transform_1, window_bounds = array<i64: 8, 128>}, {pipeline_mode = #tpu.pipeline_mode<synchronous>, transform_indices = @transform_2, window_bounds = array<i64: 128, 512>}, {pipeline_mode = #tpu.pipeline_mode<synchronous>, transform_indices = @transform_3, window_bounds = array<i64: 128, 512>}, {pipeline_mode = #tpu.pipeline_mode<synchronous>, transform_indices = @transform_4, window_bounds = array<i64: 1, 512>}, {pipeline_mode = #tpu.pipeline_mode<synchronous>, transform_indices = @transform_5, window_bounds = array<i64: 8, 1>}, {transform_indices = @transform_6, window_bounds = array<i64: 8, 8, 128>}, {pipeline_mode = #tpu.pipeline_mode<synchronous>, transform_indices = @transform_7, window_bounds = array<i64: 8, 128>}, {pipeline_mode = #tpu.pipeline_mode<synchronous>, transform_indices = @transform_8, window_bounds = array<i64: 8, 128>}]} {
    %c0_i32 = arith.constant 0 : i32
    %0 = arith.cmpi eq, %arg0, %c0_i32 : i32
    %1 = arith.extui %0 : i1 to i32
    %c0_i32_0 = arith.constant 0 : i32
    %2 = arith.cmpi ne, %1, %c0_i32_0 : i32
    scf.if %2 {
      %cst_144 = arith.constant 0.000000e+00 : f32
      %384 = vector.broadcast %cst_144 : f32 to vector<8x128xf32>
      %c0_145 = arith.constant 0 : index
      %c0_146 = arith.constant 0 : index
      %385 = vector.load %arg10[%c0_145, %c0_146] : memref<8x128xf32, #tpu.memory_space<vmem>>, vector<8x128xf32>
      tpu.vector_store %arg10[%c0_145, %c0_146], %384 {strides = array<i32>} : memref<8x128xf32, #tpu.memory_space<vmem>>, vector<8x128xf32>,
      %c0_147 = arith.constant 0 : index
      %c0_148 = arith.constant 0 : index
      %386 = vector.load %arg2[%c0_147, %c0_148] : memref<8x128xf32, #tpu.memory_space<vmem>>, vector<8x128xf32>
      %c0_149 = arith.constant 0 : index
      %c0_150 = arith.constant 0 : index
      %387 = vector.load %arg11[%c0_149, %c0_150] : memref<8x128xf32, #tpu.memory_space<vmem>>, vector<8x128xf32>
      tpu.vector_store %arg11[%c0_149, %c0_150], %386 {strides = array<i32>} : memref<8x128xf32, #tpu.memory_space<vmem>>, vector<8x128xf32>,
    } else {
    }
    %c0 = arith.constant 0 : index
    %c0_1 = arith.constant 0 : index
    %c0_2 = arith.constant 0 : index
    %3 = vector.load %arg1[%c0, %c0_1, %c0_2] : memref<8x8x128xbf16, #tpu.memory_space<vmem>>, vector<8x8x128xbf16>
    %4 = vector.shape_cast %3 : vector<8x8x128xbf16> to vector<64x128xbf16>
    %c0_3 = arith.constant 0 : index
    %c0_4 = arith.constant 0 : index
    %5 = vector.load %arg3[%c0_3, %c0_4] : memref<128x512xbf16, #tpu.memory_space<vmem>>, vector<128x512xbf16>
    %cst = arith.constant dense<0.000000e+00> : vector<64x512xf32>
    %6 = tpu.matmul %4, %5, %cst {dimension_numbers = #tpu.dot_dimension_numbers<[1], [0], [0], [1], [0, 0, 1, 1], [], []>} : vector<64x128xbf16>, vector<128x512xbf16>, vector<64x512xf32> -> vector<64x512xf32>
    %c0_5 = arith.constant 0 : index
    %c0_6 = arith.constant 0 : index
    %7 = vector.load %arg5[%c0_5, %c0_6] : memref<1x512xf32, #tpu.memory_space<vmem>>, vector<1x512xf32>
    %8 = vector.broadcast %7 : vector<1x512xf32> to vector<64x512xf32>
    %9 = arith.addf %6, %8 : vector<64x512xf32>
    %c0_7 = arith.constant 0 : index
    %c0_8 = arith.constant 0 : index
    %10 = vector.load %arg12[%c0_7, %c0_8] : memref<64x512xf32, #tpu.memory_space<vmem>>, vector<64x512xf32>
    tpu.vector_store %arg12[%c0_7, %c0_8], %9 {strides = array<i32>} : memref<64x512xf32, #tpu.memory_space<vmem>>, vector<64x512xf32>,
    %c0_9 = arith.constant 0 : index
    %c0_10 = arith.constant 0 : index
    %11 = vector.load %arg6[%c0_9, %c0_10] : memref<8x1xi32, #tpu.memory_space<vmem>>, vector<8x1xi32>
    %c0_11 = arith.constant 0 : index
    %c0_12 = arith.constant 0 : index
    %12 = vector.load %arg4[%c0_11, %c0_12] : memref<128x512xbf16, #tpu.memory_space<vmem>>, vector<128x512xbf16>
    %c0_i32_13 = arith.constant 0 : i32
    %c8_i32 = arith.constant 8 : i32
    %13 = arith.muli %arg0, %c8_i32 : i32
    %14 = arith.addi %13, %c0_i32_13 : i32
    %c0_14 = arith.constant 0 : index
    %c0_15 = arith.constant 0 : index
    %15 = vector.load %arg10[%c0_14, %c0_15] : memref<8x128xf32, #tpu.memory_space<vmem>>, vector<8x128xf32>
    %c0_16 = arith.constant 0 : index
    %c0_17 = arith.constant 0 : index
    %16 = vector.load %arg11[%c0_16, %c0_17] : memref<8x128xf32, #tpu.memory_space<vmem>>, vector<8x128xf32>
    %c8_i32_18 = arith.constant 8 : i32
    %17 = arith.muli %c0_i32_13, %c8_i32_18 : i32
    %18 = tpu.assume_multiple %17, 8 : i32
    %19 = arith.index_cast %18 : i32 to index
    %c0_19 = arith.constant 0 : index
    %20 = vector.load %arg12[%19, %c0_19] : memref<64x512xf32, #tpu.memory_space<vmem>>, vector<8x512xf32>
    %21 = arith.truncf %15 : vector<8x128xf32> to vector<8x128xbf16>
    %cst_20 = arith.constant dense<0.000000e+00> : vector<8x512xf32>
    %22 = tpu.matmul %21, %12, %cst_20 {dimension_numbers = #tpu.dot_dimension_numbers<[1], [0], [0], [1], [0, 0, 1, 1], [], []>} : vector<8x128xbf16>, vector<128x512xbf16>, vector<8x512xf32> -> vector<8x512xf32>
    %23 = arith.addf %20, %22 : vector<8x512xf32>
    %24 = vector.extract_strided_slice %23 {offsets = [0, 0], sizes = [8, 384], strides = [1, 1]} : vector<8x512xf32> to vector<8x384xf32>
    %25 = arith.negf %24 : vector<8x384xf32>
    %26 = math.exp %25 : vector<8x384xf32>
    %cst_21 = arith.constant 1.000000e+00 : f32
    %27 = vector.broadcast %cst_21 : f32 to vector<8x384xf32>
    %28 = arith.addf %27, %26 : vector<8x384xf32>
    %29 = arith.divf %27, %28 : vector<8x384xf32>
    %30 = vector.extract_strided_slice %29 {offsets = [0, 0], sizes = [8, 128], strides = [1, 1]} : vector<8x384xf32> to vector<8x128xf32>
    %31 = vector.extract_strided_slice %29 {offsets = [0, 128], sizes = [8, 128], strides = [1, 1]} : vector<8x384xf32> to vector<8x128xf32>
    %32 = vector.extract_strided_slice %29 {offsets = [0, 256], sizes = [8, 128], strides = [1, 1]} : vector<8x384xf32> to vector<8x128xf32>
    %33 = vector.extract_strided_slice %23 {offsets = [0, 384], sizes = [8, 128], strides = [1, 1]} : vector<8x512xf32> to vector<8x128xf32>
    %34 = math.tanh %33 : vector<8x128xf32>
    %35 = arith.mulf %31, %16 : vector<8x128xf32>
    %36 = arith.mulf %30, %34 : vector<8x128xf32>
    %37 = arith.addf %35, %36 : vector<8x128xf32>
    %38 = math.tanh %37 : vector<8x128xf32>
    %39 = arith.mulf %32, %38 : vector<8x128xf32>
    %40 = vector.broadcast %14 : i32 to vector<8x1xi32>
    %41 = arith.cmpi slt, %40, %11 : vector<8x1xi32>
    %42 = vector.shape_cast %41 : vector<8x1xi1> to vector<8x1xi1>
    %43 = vector.broadcast %42 : vector<8x1xi1> to vector<8x128xi1>
    %44 = arith.select %43, %39, %15 : vector<8x128xi1>, vector<8x128xf32>
    %c0_22 = arith.constant 0 : index
    %c0_23 = arith.constant 0 : index
    %45 = vector.load %arg10[%c0_22, %c0_23] : memref<8x128xf32, #tpu.memory_space<vmem>>, vector<8x128xf32>
    tpu.vector_store %arg10[%c0_22, %c0_23], %44 {strides = array<i32>} : memref<8x128xf32, #tpu.memory_space<vmem>>, vector<8x128xf32>,
    %46 = vector.shape_cast %41 : vector<8x1xi1> to vector<8x1xi1>
    %47 = vector.broadcast %46 : vector<8x1xi1> to vector<8x128xi1>
    %48 = arith.select %47, %37, %16 : vector<8x128xi1>, vector<8x128xf32>
    %c0_24 = arith.constant 0 : index
    %c0_25 = arith.constant 0 : index
    %49 = vector.load %arg11[%c0_24, %c0_25] : memref<8x128xf32, #tpu.memory_space<vmem>>, vector<8x128xf32>
    tpu.vector_store %arg11[%c0_24, %c0_25], %48 {strides = array<i32>} : memref<8x128xf32, #tpu.memory_space<vmem>>, vector<8x128xf32>,
    %cst_26 = arith.constant 0.000000e+00 : f32
    %50 = vector.shape_cast %41 : vector<8x1xi1> to vector<8x1xi1>
    %51 = vector.broadcast %50 : vector<8x1xi1> to vector<8x128xi1>
    %52 = vector.broadcast %cst_26 : f32 to vector<8x128xf32>
    %53 = arith.select %51, %39, %52 : vector<8x128xi1>, vector<8x128xf32>
    %54 = arith.truncf %53 : vector<8x128xf32> to vector<8x128xbf16>
    %55 = arith.index_cast %c0_i32_13 : i32 to index
    %c0_27 = arith.constant 0 : index
    %c0_28 = arith.constant 0 : index
    %56 = vector.load %arg7[%55, %c0_27, %c0_28] : memref<8x8x128xbf16, #tpu.memory_space<vmem>>, vector<1x8x128xbf16>
    %57 = vector.shape_cast %56 : vector<1x8x128xbf16> to vector<8x128xbf16>
    %58 = vector.shape_cast %54 : vector<8x128xbf16> to vector<1x8x128xbf16>
    tpu.vector_store %arg7[%55, %c0_27, %c0_28], %58 {strides = array<i32>} : memref<8x8x128xbf16, #tpu.memory_space<vmem>>, vector<1x8x128xbf16>,
    %c1_i32 = arith.constant 1 : i32
    %c8_i32_29 = arith.constant 8 : i32
    %59 = arith.muli %arg0, %c8_i32_29 : i32
    %60 = arith.addi %59, %c1_i32 : i32
    %c0_30 = arith.constant 0 : index
    %c0_31 = arith.constant 0 : index
    %61 = vector.load %arg10[%c0_30, %c0_31] : memref<8x128xf32, #tpu.memory_space<vmem>>, vector<8x128xf32>
    %c0_32 = arith.constant 0 : index
    %c0_33 = arith.constant 0 : index
    %62 = vector.load %arg11[%c0_32, %c0_33] : memref<8x128xf32, #tpu.memory_space<vmem>>, vector<8x128xf32>
    %c8_i32_34 = arith.constant 8 : i32
    %63 = arith.muli %c1_i32, %c8_i32_34 : i32
    %64 = tpu.assume_multiple %63, 8 : i32
    %65 = arith.index_cast %64 : i32 to index
    %c0_35 = arith.constant 0 : index
    %66 = vector.load %arg12[%65, %c0_35] : memref<64x512xf32, #tpu.memory_space<vmem>>, vector<8x512xf32>
    %67 = arith.truncf %61 : vector<8x128xf32> to vector<8x128xbf16>
    %cst_36 = arith.constant dense<0.000000e+00> : vector<8x512xf32>
    %68 = tpu.matmul %67, %12, %cst_36 {dimension_numbers = #tpu.dot_dimension_numbers<[1], [0], [0], [1], [0, 0, 1, 1], [], []>} : vector<8x128xbf16>, vector<128x512xbf16>, vector<8x512xf32> -> vector<8x512xf32>
    %69 = arith.addf %66, %68 : vector<8x512xf32>
    %70 = vector.extract_strided_slice %69 {offsets = [0, 0], sizes = [8, 384], strides = [1, 1]} : vector<8x512xf32> to vector<8x384xf32>
    %71 = arith.negf %70 : vector<8x384xf32>
    %72 = math.exp %71 : vector<8x384xf32>
    %cst_37 = arith.constant 1.000000e+00 : f32
    %73 = vector.broadcast %cst_37 : f32 to vector<8x384xf32>
    %74 = arith.addf %73, %72 : vector<8x384xf32>
    %75 = arith.divf %73, %74 : vector<8x384xf32>
    %76 = vector.extract_strided_slice %75 {offsets = [0, 0], sizes = [8, 128], strides = [1, 1]} : vector<8x384xf32> to vector<8x128xf32>
    %77 = vector.extract_strided_slice %75 {offsets = [0, 128], sizes = [8, 128], strides = [1, 1]} : vector<8x384xf32> to vector<8x128xf32>
    %78 = vector.extract_strided_slice %75 {offsets = [0, 256], sizes = [8, 128], strides = [1, 1]} : vector<8x384xf32> to vector<8x128xf32>
    %79 = vector.extract_strided_slice %69 {offsets = [0, 384], sizes = [8, 128], strides = [1, 1]} : vector<8x512xf32> to vector<8x128xf32>
    %80 = math.tanh %79 : vector<8x128xf32>
    %81 = arith.mulf %77, %62 : vector<8x128xf32>
    %82 = arith.mulf %76, %80 : vector<8x128xf32>
    %83 = arith.addf %81, %82 : vector<8x128xf32>
    %84 = math.tanh %83 : vector<8x128xf32>
    %85 = arith.mulf %78, %84 : vector<8x128xf32>
    %86 = vector.broadcast %60 : i32 to vector<8x1xi32>
    %87 = arith.cmpi slt, %86, %11 : vector<8x1xi32>
    %88 = vector.shape_cast %87 : vector<8x1xi1> to vector<8x1xi1>
    %89 = vector.broadcast %88 : vector<8x1xi1> to vector<8x128xi1>
    %90 = arith.select %89, %85, %61 : vector<8x128xi1>, vector<8x128xf32>
    %c0_38 = arith.constant 0 : index
    %c0_39 = arith.constant 0 : index
    %91 = vector.load %arg10[%c0_38, %c0_39] : memref<8x128xf32, #tpu.memory_space<vmem>>, vector<8x128xf32>
    tpu.vector_store %arg10[%c0_38, %c0_39], %90 {strides = array<i32>} : memref<8x128xf32, #tpu.memory_space<vmem>>, vector<8x128xf32>,
    %92 = vector.shape_cast %87 : vector<8x1xi1> to vector<8x1xi1>
    %93 = vector.broadcast %92 : vector<8x1xi1> to vector<8x128xi1>
    %94 = arith.select %93, %83, %62 : vector<8x128xi1>, vector<8x128xf32>
    %c0_40 = arith.constant 0 : index
    %c0_41 = arith.constant 0 : index
    %95 = vector.load %arg11[%c0_40, %c0_41] : memref<8x128xf32, #tpu.memory_space<vmem>>, vector<8x128xf32>
    tpu.vector_store %arg11[%c0_40, %c0_41], %94 {strides = array<i32>} : memref<8x128xf32, #tpu.memory_space<vmem>>, vector<8x128xf32>,
    %cst_42 = arith.constant 0.000000e+00 : f32
    %96 = vector.shape_cast %87 : vector<8x1xi1> to vector<8x1xi1>
    %97 = vector.broadcast %96 : vector<8x1xi1> to vector<8x128xi1>
    %98 = vector.broadcast %cst_42 : f32 to vector<8x128xf32>
    %99 = arith.select %97, %85, %98 : vector<8x128xi1>, vector<8x128xf32>
    %100 = arith.truncf %99 : vector<8x128xf32> to vector<8x128xbf16>
    %101 = arith.index_cast %c1_i32 : i32 to index
    %c0_43 = arith.constant 0 : index
    %c0_44 = arith.constant 0 : index
    %102 = vector.load %arg7[%101, %c0_43, %c0_44] : memref<8x8x128xbf16, #tpu.memory_space<vmem>>, vector<1x8x128xbf16>
    %103 = vector.shape_cast %102 : vector<1x8x128xbf16> to vector<8x128xbf16>
    %104 = vector.shape_cast %100 : vector<8x128xbf16> to vector<1x8x128xbf16>
    tpu.vector_store %arg7[%101, %c0_43, %c0_44], %104 {strides = array<i32>} : memref<8x8x128xbf16, #tpu.memory_space<vmem>>, vector<1x8x128xbf16>,
    %c2_i32 = arith.constant 2 : i32
    %c8_i32_45 = arith.constant 8 : i32
    %105 = arith.muli %arg0, %c8_i32_45 : i32
    %106 = arith.addi %105, %c2_i32 : i32
    %c0_46 = arith.constant 0 : index
    %c0_47 = arith.constant 0 : index
    %107 = vector.load %arg10[%c0_46, %c0_47] : memref<8x128xf32, #tpu.memory_space<vmem>>, vector<8x128xf32>
    %c0_48 = arith.constant 0 : index
    %c0_49 = arith.constant 0 : index
    %108 = vector.load %arg11[%c0_48, %c0_49] : memref<8x128xf32, #tpu.memory_space<vmem>>, vector<8x128xf32>
    %c8_i32_50 = arith.constant 8 : i32
    %109 = arith.muli %c2_i32, %c8_i32_50 : i32
    %110 = tpu.assume_multiple %109, 8 : i32
    %111 = arith.index_cast %110 : i32 to index
    %c0_51 = arith.constant 0 : index
    %112 = vector.load %arg12[%111, %c0_51] : memref<64x512xf32, #tpu.memory_space<vmem>>, vector<8x512xf32>
    %113 = arith.truncf %107 : vector<8x128xf32> to vector<8x128xbf16>
    %cst_52 = arith.constant dense<0.000000e+00> : vector<8x512xf32>
    %114 = tpu.matmul %113, %12, %cst_52 {dimension_numbers = #tpu.dot_dimension_numbers<[1], [0], [0], [1], [0, 0, 1, 1], [], []>} : vector<8x128xbf16>, vector<128x512xbf16>, vector<8x512xf32> -> vector<8x512xf32>
    %115 = arith.addf %112, %114 : vector<8x512xf32>
    %116 = vector.extract_strided_slice %115 {offsets = [0, 0], sizes = [8, 384], strides = [1, 1]} : vector<8x512xf32> to vector<8x384xf32>
    %117 = arith.negf %116 : vector<8x384xf32>
    %118 = math.exp %117 : vector<8x384xf32>
    %cst_53 = arith.constant 1.000000e+00 : f32
    %119 = vector.broadcast %cst_53 : f32 to vector<8x384xf32>
    %120 = arith.addf %119, %118 : vector<8x384xf32>
    %121 = arith.divf %119, %120 : vector<8x384xf32>
    %122 = vector.extract_strided_slice %121 {offsets = [0, 0], sizes = [8, 128], strides = [1, 1]} : vector<8x384xf32> to vector<8x128xf32>
    %123 = vector.extract_strided_slice %121 {offsets = [0, 128], sizes = [8, 128], strides = [1, 1]} : vector<8x384xf32> to vector<8x128xf32>
    %124 = vector.extract_strided_slice %121 {offsets = [0, 256], sizes = [8, 128], strides = [1, 1]} : vector<8x384xf32> to vector<8x128xf32>
    %125 = vector.extract_strided_slice %115 {offsets = [0, 384], sizes = [8, 128], strides = [1, 1]} : vector<8x512xf32> to vector<8x128xf32>
    %126 = math.tanh %125 : vector<8x128xf32>
    %127 = arith.mulf %123, %108 : vector<8x128xf32>
    %128 = arith.mulf %122, %126 : vector<8x128xf32>
    %129 = arith.addf %127, %128 : vector<8x128xf32>
    %130 = math.tanh %129 : vector<8x128xf32>
    %131 = arith.mulf %124, %130 : vector<8x128xf32>
    %132 = vector.broadcast %106 : i32 to vector<8x1xi32>
    %133 = arith.cmpi slt, %132, %11 : vector<8x1xi32>
    %134 = vector.shape_cast %133 : vector<8x1xi1> to vector<8x1xi1>
    %135 = vector.broadcast %134 : vector<8x1xi1> to vector<8x128xi1>
    %136 = arith.select %135, %131, %107 : vector<8x128xi1>, vector<8x128xf32>
    %c0_54 = arith.constant 0 : index
    %c0_55 = arith.constant 0 : index
    %137 = vector.load %arg10[%c0_54, %c0_55] : memref<8x128xf32, #tpu.memory_space<vmem>>, vector<8x128xf32>
    tpu.vector_store %arg10[%c0_54, %c0_55], %136 {strides = array<i32>} : memref<8x128xf32, #tpu.memory_space<vmem>>, vector<8x128xf32>,
    %138 = vector.shape_cast %133 : vector<8x1xi1> to vector<8x1xi1>
    %139 = vector.broadcast %138 : vector<8x1xi1> to vector<8x128xi1>
    %140 = arith.select %139, %129, %108 : vector<8x128xi1>, vector<8x128xf32>
    %c0_56 = arith.constant 0 : index
    %c0_57 = arith.constant 0 : index
    %141 = vector.load %arg11[%c0_56, %c0_57] : memref<8x128xf32, #tpu.memory_space<vmem>>, vector<8x128xf32>
    tpu.vector_store %arg11[%c0_56, %c0_57], %140 {strides = array<i32>} : memref<8x128xf32, #tpu.memory_space<vmem>>, vector<8x128xf32>,
    %cst_58 = arith.constant 0.000000e+00 : f32
    %142 = vector.shape_cast %133 : vector<8x1xi1> to vector<8x1xi1>
    %143 = vector.broadcast %142 : vector<8x1xi1> to vector<8x128xi1>
    %144 = vector.broadcast %cst_58 : f32 to vector<8x128xf32>
    %145 = arith.select %143, %131, %144 : vector<8x128xi1>, vector<8x128xf32>
    %146 = arith.truncf %145 : vector<8x128xf32> to vector<8x128xbf16>
    %147 = arith.index_cast %c2_i32 : i32 to index
    %c0_59 = arith.constant 0 : index
    %c0_60 = arith.constant 0 : index
    %148 = vector.load %arg7[%147, %c0_59, %c0_60] : memref<8x8x128xbf16, #tpu.memory_space<vmem>>, vector<1x8x128xbf16>
    %149 = vector.shape_cast %148 : vector<1x8x128xbf16> to vector<8x128xbf16>
    %150 = vector.shape_cast %146 : vector<8x128xbf16> to vector<1x8x128xbf16>
    tpu.vector_store %arg7[%147, %c0_59, %c0_60], %150 {strides = array<i32>} : memref<8x8x128xbf16, #tpu.memory_space<vmem>>, vector<1x8x128xbf16>,
    %c3_i32 = arith.constant 3 : i32
    %c8_i32_61 = arith.constant 8 : i32
    %151 = arith.muli %arg0, %c8_i32_61 : i32
    %152 = arith.addi %151, %c3_i32 : i32
    %c0_62 = arith.constant 0 : index
    %c0_63 = arith.constant 0 : index
    %153 = vector.load %arg10[%c0_62, %c0_63] : memref<8x128xf32, #tpu.memory_space<vmem>>, vector<8x128xf32>
    %c0_64 = arith.constant 0 : index
    %c0_65 = arith.constant 0 : index
    %154 = vector.load %arg11[%c0_64, %c0_65] : memref<8x128xf32, #tpu.memory_space<vmem>>, vector<8x128xf32>
    %c8_i32_66 = arith.constant 8 : i32
    %155 = arith.muli %c3_i32, %c8_i32_66 : i32
    %156 = tpu.assume_multiple %155, 8 : i32
    %157 = arith.index_cast %156 : i32 to index
    %c0_67 = arith.constant 0 : index
    %158 = vector.load %arg12[%157, %c0_67] : memref<64x512xf32, #tpu.memory_space<vmem>>, vector<8x512xf32>
    %159 = arith.truncf %153 : vector<8x128xf32> to vector<8x128xbf16>
    %cst_68 = arith.constant dense<0.000000e+00> : vector<8x512xf32>
    %160 = tpu.matmul %159, %12, %cst_68 {dimension_numbers = #tpu.dot_dimension_numbers<[1], [0], [0], [1], [0, 0, 1, 1], [], []>} : vector<8x128xbf16>, vector<128x512xbf16>, vector<8x512xf32> -> vector<8x512xf32>
    %161 = arith.addf %158, %160 : vector<8x512xf32>
    %162 = vector.extract_strided_slice %161 {offsets = [0, 0], sizes = [8, 384], strides = [1, 1]} : vector<8x512xf32> to vector<8x384xf32>
    %163 = arith.negf %162 : vector<8x384xf32>
    %164 = math.exp %163 : vector<8x384xf32>
    %cst_69 = arith.constant 1.000000e+00 : f32
    %165 = vector.broadcast %cst_69 : f32 to vector<8x384xf32>
    %166 = arith.addf %165, %164 : vector<8x384xf32>
    %167 = arith.divf %165, %166 : vector<8x384xf32>
    %168 = vector.extract_strided_slice %167 {offsets = [0, 0], sizes = [8, 128], strides = [1, 1]} : vector<8x384xf32> to vector<8x128xf32>
    %169 = vector.extract_strided_slice %167 {offsets = [0, 128], sizes = [8, 128], strides = [1, 1]} : vector<8x384xf32> to vector<8x128xf32>
    %170 = vector.extract_strided_slice %167 {offsets = [0, 256], sizes = [8, 128], strides = [1, 1]} : vector<8x384xf32> to vector<8x128xf32>
    %171 = vector.extract_strided_slice %161 {offsets = [0, 384], sizes = [8, 128], strides = [1, 1]} : vector<8x512xf32> to vector<8x128xf32>
    %172 = math.tanh %171 : vector<8x128xf32>
    %173 = arith.mulf %169, %154 : vector<8x128xf32>
    %174 = arith.mulf %168, %172 : vector<8x128xf32>
    %175 = arith.addf %173, %174 : vector<8x128xf32>
    %176 = math.tanh %175 : vector<8x128xf32>
    %177 = arith.mulf %170, %176 : vector<8x128xf32>
    %178 = vector.broadcast %152 : i32 to vector<8x1xi32>
    %179 = arith.cmpi slt, %178, %11 : vector<8x1xi32>
    %180 = vector.shape_cast %179 : vector<8x1xi1> to vector<8x1xi1>
    %181 = vector.broadcast %180 : vector<8x1xi1> to vector<8x128xi1>
    %182 = arith.select %181, %177, %153 : vector<8x128xi1>, vector<8x128xf32>
    %c0_70 = arith.constant 0 : index
    %c0_71 = arith.constant 0 : index
    %183 = vector.load %arg10[%c0_70, %c0_71] : memref<8x128xf32, #tpu.memory_space<vmem>>, vector<8x128xf32>
    tpu.vector_store %arg10[%c0_70, %c0_71], %182 {strides = array<i32>} : memref<8x128xf32, #tpu.memory_space<vmem>>, vector<8x128xf32>,
    %184 = vector.shape_cast %179 : vector<8x1xi1> to vector<8x1xi1>
    %185 = vector.broadcast %184 : vector<8x1xi1> to vector<8x128xi1>
    %186 = arith.select %185, %175, %154 : vector<8x128xi1>, vector<8x128xf32>
    %c0_72 = arith.constant 0 : index
    %c0_73 = arith.constant 0 : index
    %187 = vector.load %arg11[%c0_72, %c0_73] : memref<8x128xf32, #tpu.memory_space<vmem>>, vector<8x128xf32>
    tpu.vector_store %arg11[%c0_72, %c0_73], %186 {strides = array<i32>} : memref<8x128xf32, #tpu.memory_space<vmem>>, vector<8x128xf32>,
    %cst_74 = arith.constant 0.000000e+00 : f32
    %188 = vector.shape_cast %179 : vector<8x1xi1> to vector<8x1xi1>
    %189 = vector.broadcast %188 : vector<8x1xi1> to vector<8x128xi1>
    %190 = vector.broadcast %cst_74 : f32 to vector<8x128xf32>
    %191 = arith.select %189, %177, %190 : vector<8x128xi1>, vector<8x128xf32>
    %192 = arith.truncf %191 : vector<8x128xf32> to vector<8x128xbf16>
    %193 = arith.index_cast %c3_i32 : i32 to index
    %c0_75 = arith.constant 0 : index
    %c0_76 = arith.constant 0 : index
    %194 = vector.load %arg7[%193, %c0_75, %c0_76] : memref<8x8x128xbf16, #tpu.memory_space<vmem>>, vector<1x8x128xbf16>
    %195 = vector.shape_cast %194 : vector<1x8x128xbf16> to vector<8x128xbf16>
    %196 = vector.shape_cast %192 : vector<8x128xbf16> to vector<1x8x128xbf16>
    tpu.vector_store %arg7[%193, %c0_75, %c0_76], %196 {strides = array<i32>} : memref<8x8x128xbf16, #tpu.memory_space<vmem>>, vector<1x8x128xbf16>,
    %c4_i32 = arith.constant 4 : i32
    %c8_i32_77 = arith.constant 8 : i32
    %197 = arith.muli %arg0, %c8_i32_77 : i32
    %198 = arith.addi %197, %c4_i32 : i32
    %c0_78 = arith.constant 0 : index
    %c0_79 = arith.constant 0 : index
    %199 = vector.load %arg10[%c0_78, %c0_79] : memref<8x128xf32, #tpu.memory_space<vmem>>, vector<8x128xf32>
    %c0_80 = arith.constant 0 : index
    %c0_81 = arith.constant 0 : index
    %200 = vector.load %arg11[%c0_80, %c0_81] : memref<8x128xf32, #tpu.memory_space<vmem>>, vector<8x128xf32>
    %c8_i32_82 = arith.constant 8 : i32
    %201 = arith.muli %c4_i32, %c8_i32_82 : i32
    %202 = tpu.assume_multiple %201, 8 : i32
    %203 = arith.index_cast %202 : i32 to index
    %c0_83 = arith.constant 0 : index
    %204 = vector.load %arg12[%203, %c0_83] : memref<64x512xf32, #tpu.memory_space<vmem>>, vector<8x512xf32>
    %205 = arith.truncf %199 : vector<8x128xf32> to vector<8x128xbf16>
    %cst_84 = arith.constant dense<0.000000e+00> : vector<8x512xf32>
    %206 = tpu.matmul %205, %12, %cst_84 {dimension_numbers = #tpu.dot_dimension_numbers<[1], [0], [0], [1], [0, 0, 1, 1], [], []>} : vector<8x128xbf16>, vector<128x512xbf16>, vector<8x512xf32> -> vector<8x512xf32>
    %207 = arith.addf %204, %206 : vector<8x512xf32>
    %208 = vector.extract_strided_slice %207 {offsets = [0, 0], sizes = [8, 384], strides = [1, 1]} : vector<8x512xf32> to vector<8x384xf32>
    %209 = arith.negf %208 : vector<8x384xf32>
    %210 = math.exp %209 : vector<8x384xf32>
    %cst_85 = arith.constant 1.000000e+00 : f32
    %211 = vector.broadcast %cst_85 : f32 to vector<8x384xf32>
    %212 = arith.addf %211, %210 : vector<8x384xf32>
    %213 = arith.divf %211, %212 : vector<8x384xf32>
    %214 = vector.extract_strided_slice %213 {offsets = [0, 0], sizes = [8, 128], strides = [1, 1]} : vector<8x384xf32> to vector<8x128xf32>
    %215 = vector.extract_strided_slice %213 {offsets = [0, 128], sizes = [8, 128], strides = [1, 1]} : vector<8x384xf32> to vector<8x128xf32>
    %216 = vector.extract_strided_slice %213 {offsets = [0, 256], sizes = [8, 128], strides = [1, 1]} : vector<8x384xf32> to vector<8x128xf32>
    %217 = vector.extract_strided_slice %207 {offsets = [0, 384], sizes = [8, 128], strides = [1, 1]} : vector<8x512xf32> to vector<8x128xf32>
    %218 = math.tanh %217 : vector<8x128xf32>
    %219 = arith.mulf %215, %200 : vector<8x128xf32>
    %220 = arith.mulf %214, %218 : vector<8x128xf32>
    %221 = arith.addf %219, %220 : vector<8x128xf32>
    %222 = math.tanh %221 : vector<8x128xf32>
    %223 = arith.mulf %216, %222 : vector<8x128xf32>
    %224 = vector.broadcast %198 : i32 to vector<8x1xi32>
    %225 = arith.cmpi slt, %224, %11 : vector<8x1xi32>
    %226 = vector.shape_cast %225 : vector<8x1xi1> to vector<8x1xi1>
    %227 = vector.broadcast %226 : vector<8x1xi1> to vector<8x128xi1>
    %228 = arith.select %227, %223, %199 : vector<8x128xi1>, vector<8x128xf32>
    %c0_86 = arith.constant 0 : index
    %c0_87 = arith.constant 0 : index
    %229 = vector.load %arg10[%c0_86, %c0_87] : memref<8x128xf32, #tpu.memory_space<vmem>>, vector<8x128xf32>
    tpu.vector_store %arg10[%c0_86, %c0_87], %228 {strides = array<i32>} : memref<8x128xf32, #tpu.memory_space<vmem>>, vector<8x128xf32>,
    %230 = vector.shape_cast %225 : vector<8x1xi1> to vector<8x1xi1>
    %231 = vector.broadcast %230 : vector<8x1xi1> to vector<8x128xi1>
    %232 = arith.select %231, %221, %200 : vector<8x128xi1>, vector<8x128xf32>
    %c0_88 = arith.constant 0 : index
    %c0_89 = arith.constant 0 : index
    %233 = vector.load %arg11[%c0_88, %c0_89] : memref<8x128xf32, #tpu.memory_space<vmem>>, vector<8x128xf32>
    tpu.vector_store %arg11[%c0_88, %c0_89], %232 {strides = array<i32>} : memref<8x128xf32, #tpu.memory_space<vmem>>, vector<8x128xf32>,
    %cst_90 = arith.constant 0.000000e+00 : f32
    %234 = vector.shape_cast %225 : vector<8x1xi1> to vector<8x1xi1>
    %235 = vector.broadcast %234 : vector<8x1xi1> to vector<8x128xi1>
    %236 = vector.broadcast %cst_90 : f32 to vector<8x128xf32>
    %237 = arith.select %235, %223, %236 : vector<8x128xi1>, vector<8x128xf32>
    %238 = arith.truncf %237 : vector<8x128xf32> to vector<8x128xbf16>
    %239 = arith.index_cast %c4_i32 : i32 to index
    %c0_91 = arith.constant 0 : index
    %c0_92 = arith.constant 0 : index
    %240 = vector.load %arg7[%239, %c0_91, %c0_92] : memref<8x8x128xbf16, #tpu.memory_space<vmem>>, vector<1x8x128xbf16>
    %241 = vector.shape_cast %240 : vector<1x8x128xbf16> to vector<8x128xbf16>
    %242 = vector.shape_cast %238 : vector<8x128xbf16> to vector<1x8x128xbf16>
    tpu.vector_store %arg7[%239, %c0_91, %c0_92], %242 {strides = array<i32>} : memref<8x8x128xbf16, #tpu.memory_space<vmem>>, vector<1x8x128xbf16>,
    %c5_i32 = arith.constant 5 : i32
    %c8_i32_93 = arith.constant 8 : i32
    %243 = arith.muli %arg0, %c8_i32_93 : i32
    %244 = arith.addi %243, %c5_i32 : i32
    %c0_94 = arith.constant 0 : index
    %c0_95 = arith.constant 0 : index
    %245 = vector.load %arg10[%c0_94, %c0_95] : memref<8x128xf32, #tpu.memory_space<vmem>>, vector<8x128xf32>
    %c0_96 = arith.constant 0 : index
    %c0_97 = arith.constant 0 : index
    %246 = vector.load %arg11[%c0_96, %c0_97] : memref<8x128xf32, #tpu.memory_space<vmem>>, vector<8x128xf32>
    %c8_i32_98 = arith.constant 8 : i32
    %247 = arith.muli %c5_i32, %c8_i32_98 : i32
    %248 = tpu.assume_multiple %247, 8 : i32
    %249 = arith.index_cast %248 : i32 to index
    %c0_99 = arith.constant 0 : index
    %250 = vector.load %arg12[%249, %c0_99] : memref<64x512xf32, #tpu.memory_space<vmem>>, vector<8x512xf32>
    %251 = arith.truncf %245 : vector<8x128xf32> to vector<8x128xbf16>
    %cst_100 = arith.constant dense<0.000000e+00> : vector<8x512xf32>
    %252 = tpu.matmul %251, %12, %cst_100 {dimension_numbers = #tpu.dot_dimension_numbers<[1], [0], [0], [1], [0, 0, 1, 1], [], []>} : vector<8x128xbf16>, vector<128x512xbf16>, vector<8x512xf32> -> vector<8x512xf32>
    %253 = arith.addf %250, %252 : vector<8x512xf32>
    %254 = vector.extract_strided_slice %253 {offsets = [0, 0], sizes = [8, 384], strides = [1, 1]} : vector<8x512xf32> to vector<8x384xf32>
    %255 = arith.negf %254 : vector<8x384xf32>
    %256 = math.exp %255 : vector<8x384xf32>
    %cst_101 = arith.constant 1.000000e+00 : f32
    %257 = vector.broadcast %cst_101 : f32 to vector<8x384xf32>
    %258 = arith.addf %257, %256 : vector<8x384xf32>
    %259 = arith.divf %257, %258 : vector<8x384xf32>
    %260 = vector.extract_strided_slice %259 {offsets = [0, 0], sizes = [8, 128], strides = [1, 1]} : vector<8x384xf32> to vector<8x128xf32>
    %261 = vector.extract_strided_slice %259 {offsets = [0, 128], sizes = [8, 128], strides = [1, 1]} : vector<8x384xf32> to vector<8x128xf32>
    %262 = vector.extract_strided_slice %259 {offsets = [0, 256], sizes = [8, 128], strides = [1, 1]} : vector<8x384xf32> to vector<8x128xf32>
    %263 = vector.extract_strided_slice %253 {offsets = [0, 384], sizes = [8, 128], strides = [1, 1]} : vector<8x512xf32> to vector<8x128xf32>
    %264 = math.tanh %263 : vector<8x128xf32>
    %265 = arith.mulf %261, %246 : vector<8x128xf32>
    %266 = arith.mulf %260, %264 : vector<8x128xf32>
    %267 = arith.addf %265, %266 : vector<8x128xf32>
    %268 = math.tanh %267 : vector<8x128xf32>
    %269 = arith.mulf %262, %268 : vector<8x128xf32>
    %270 = vector.broadcast %244 : i32 to vector<8x1xi32>
    %271 = arith.cmpi slt, %270, %11 : vector<8x1xi32>
    %272 = vector.shape_cast %271 : vector<8x1xi1> to vector<8x1xi1>
    %273 = vector.broadcast %272 : vector<8x1xi1> to vector<8x128xi1>
    %274 = arith.select %273, %269, %245 : vector<8x128xi1>, vector<8x128xf32>
    %c0_102 = arith.constant 0 : index
    %c0_103 = arith.constant 0 : index
    %275 = vector.load %arg10[%c0_102, %c0_103] : memref<8x128xf32, #tpu.memory_space<vmem>>, vector<8x128xf32>
    tpu.vector_store %arg10[%c0_102, %c0_103], %274 {strides = array<i32>} : memref<8x128xf32, #tpu.memory_space<vmem>>, vector<8x128xf32>,
    %276 = vector.shape_cast %271 : vector<8x1xi1> to vector<8x1xi1>
    %277 = vector.broadcast %276 : vector<8x1xi1> to vector<8x128xi1>
    %278 = arith.select %277, %267, %246 : vector<8x128xi1>, vector<8x128xf32>
    %c0_104 = arith.constant 0 : index
    %c0_105 = arith.constant 0 : index
    %279 = vector.load %arg11[%c0_104, %c0_105] : memref<8x128xf32, #tpu.memory_space<vmem>>, vector<8x128xf32>
    tpu.vector_store %arg11[%c0_104, %c0_105], %278 {strides = array<i32>} : memref<8x128xf32, #tpu.memory_space<vmem>>, vector<8x128xf32>,
    %cst_106 = arith.constant 0.000000e+00 : f32
    %280 = vector.shape_cast %271 : vector<8x1xi1> to vector<8x1xi1>
    %281 = vector.broadcast %280 : vector<8x1xi1> to vector<8x128xi1>
    %282 = vector.broadcast %cst_106 : f32 to vector<8x128xf32>
    %283 = arith.select %281, %269, %282 : vector<8x128xi1>, vector<8x128xf32>
    %284 = arith.truncf %283 : vector<8x128xf32> to vector<8x128xbf16>
    %285 = arith.index_cast %c5_i32 : i32 to index
    %c0_107 = arith.constant 0 : index
    %c0_108 = arith.constant 0 : index
    %286 = vector.load %arg7[%285, %c0_107, %c0_108] : memref<8x8x128xbf16, #tpu.memory_space<vmem>>, vector<1x8x128xbf16>
    %287 = vector.shape_cast %286 : vector<1x8x128xbf16> to vector<8x128xbf16>
    %288 = vector.shape_cast %284 : vector<8x128xbf16> to vector<1x8x128xbf16>
    tpu.vector_store %arg7[%285, %c0_107, %c0_108], %288 {strides = array<i32>} : memref<8x8x128xbf16, #tpu.memory_space<vmem>>, vector<1x8x128xbf16>,
    %c6_i32 = arith.constant 6 : i32
    %c8_i32_109 = arith.constant 8 : i32
    %289 = arith.muli %arg0, %c8_i32_109 : i32
    %290 = arith.addi %289, %c6_i32 : i32
    %c0_110 = arith.constant 0 : index
    %c0_111 = arith.constant 0 : index
    %291 = vector.load %arg10[%c0_110, %c0_111] : memref<8x128xf32, #tpu.memory_space<vmem>>, vector<8x128xf32>
    %c0_112 = arith.constant 0 : index
    %c0_113 = arith.constant 0 : index
    %292 = vector.load %arg11[%c0_112, %c0_113] : memref<8x128xf32, #tpu.memory_space<vmem>>, vector<8x128xf32>
    %c8_i32_114 = arith.constant 8 : i32
    %293 = arith.muli %c6_i32, %c8_i32_114 : i32
    %294 = tpu.assume_multiple %293, 8 : i32
    %295 = arith.index_cast %294 : i32 to index
    %c0_115 = arith.constant 0 : index
    %296 = vector.load %arg12[%295, %c0_115] : memref<64x512xf32, #tpu.memory_space<vmem>>, vector<8x512xf32>
    %297 = arith.truncf %291 : vector<8x128xf32> to vector<8x128xbf16>
    %cst_116 = arith.constant dense<0.000000e+00> : vector<8x512xf32>
    %298 = tpu.matmul %297, %12, %cst_116 {dimension_numbers = #tpu.dot_dimension_numbers<[1], [0], [0], [1], [0, 0, 1, 1], [], []>} : vector<8x128xbf16>, vector<128x512xbf16>, vector<8x512xf32> -> vector<8x512xf32>
    %299 = arith.addf %296, %298 : vector<8x512xf32>
    %300 = vector.extract_strided_slice %299 {offsets = [0, 0], sizes = [8, 384], strides = [1, 1]} : vector<8x512xf32> to vector<8x384xf32>
    %301 = arith.negf %300 : vector<8x384xf32>
    %302 = math.exp %301 : vector<8x384xf32>
    %cst_117 = arith.constant 1.000000e+00 : f32
    %303 = vector.broadcast %cst_117 : f32 to vector<8x384xf32>
    %304 = arith.addf %303, %302 : vector<8x384xf32>
    %305 = arith.divf %303, %304 : vector<8x384xf32>
    %306 = vector.extract_strided_slice %305 {offsets = [0, 0], sizes = [8, 128], strides = [1, 1]} : vector<8x384xf32> to vector<8x128xf32>
    %307 = vector.extract_strided_slice %305 {offsets = [0, 128], sizes = [8, 128], strides = [1, 1]} : vector<8x384xf32> to vector<8x128xf32>
    %308 = vector.extract_strided_slice %305 {offsets = [0, 256], sizes = [8, 128], strides = [1, 1]} : vector<8x384xf32> to vector<8x128xf32>
    %309 = vector.extract_strided_slice %299 {offsets = [0, 384], sizes = [8, 128], strides = [1, 1]} : vector<8x512xf32> to vector<8x128xf32>
    %310 = math.tanh %309 : vector<8x128xf32>
    %311 = arith.mulf %307, %292 : vector<8x128xf32>
    %312 = arith.mulf %306, %310 : vector<8x128xf32>
    %313 = arith.addf %311, %312 : vector<8x128xf32>
    %314 = math.tanh %313 : vector<8x128xf32>
    %315 = arith.mulf %308, %314 : vector<8x128xf32>
    %316 = vector.broadcast %290 : i32 to vector<8x1xi32>
    %317 = arith.cmpi slt, %316, %11 : vector<8x1xi32>
    %318 = vector.shape_cast %317 : vector<8x1xi1> to vector<8x1xi1>
    %319 = vector.broadcast %318 : vector<8x1xi1> to vector<8x128xi1>
    %320 = arith.select %319, %315, %291 : vector<8x128xi1>, vector<8x128xf32>
    %c0_118 = arith.constant 0 : index
    %c0_119 = arith.constant 0 : index
    %321 = vector.load %arg10[%c0_118, %c0_119] : memref<8x128xf32, #tpu.memory_space<vmem>>, vector<8x128xf32>
    tpu.vector_store %arg10[%c0_118, %c0_119], %320 {strides = array<i32>} : memref<8x128xf32, #tpu.memory_space<vmem>>, vector<8x128xf32>,
    %322 = vector.shape_cast %317 : vector<8x1xi1> to vector<8x1xi1>
    %323 = vector.broadcast %322 : vector<8x1xi1> to vector<8x128xi1>
    %324 = arith.select %323, %313, %292 : vector<8x128xi1>, vector<8x128xf32>
    %c0_120 = arith.constant 0 : index
    %c0_121 = arith.constant 0 : index
    %325 = vector.load %arg11[%c0_120, %c0_121] : memref<8x128xf32, #tpu.memory_space<vmem>>, vector<8x128xf32>
    tpu.vector_store %arg11[%c0_120, %c0_121], %324 {strides = array<i32>} : memref<8x128xf32, #tpu.memory_space<vmem>>, vector<8x128xf32>,
    %cst_122 = arith.constant 0.000000e+00 : f32
    %326 = vector.shape_cast %317 : vector<8x1xi1> to vector<8x1xi1>
    %327 = vector.broadcast %326 : vector<8x1xi1> to vector<8x128xi1>
    %328 = vector.broadcast %cst_122 : f32 to vector<8x128xf32>
    %329 = arith.select %327, %315, %328 : vector<8x128xi1>, vector<8x128xf32>
    %330 = arith.truncf %329 : vector<8x128xf32> to vector<8x128xbf16>
    %331 = arith.index_cast %c6_i32 : i32 to index
    %c0_123 = arith.constant 0 : index
    %c0_124 = arith.constant 0 : index
    %332 = vector.load %arg7[%331, %c0_123, %c0_124] : memref<8x8x128xbf16, #tpu.memory_space<vmem>>, vector<1x8x128xbf16>
    %333 = vector.shape_cast %332 : vector<1x8x128xbf16> to vector<8x128xbf16>
    %334 = vector.shape_cast %330 : vector<8x128xbf16> to vector<1x8x128xbf16>
    tpu.vector_store %arg7[%331, %c0_123, %c0_124], %334 {strides = array<i32>} : memref<8x8x128xbf16, #tpu.memory_space<vmem>>, vector<1x8x128xbf16>,
    %c7_i32 = arith.constant 7 : i32
    %c8_i32_125 = arith.constant 8 : i32
    %335 = arith.muli %arg0, %c8_i32_125 : i32
    %336 = arith.addi %335, %c7_i32 : i32
    %c0_126 = arith.constant 0 : index
    %c0_127 = arith.constant 0 : index
    %337 = vector.load %arg10[%c0_126, %c0_127] : memref<8x128xf32, #tpu.memory_space<vmem>>, vector<8x128xf32>
    %c0_128 = arith.constant 0 : index
    %c0_129 = arith.constant 0 : index
    %338 = vector.load %arg11[%c0_128, %c0_129] : memref<8x128xf32, #tpu.memory_space<vmem>>, vector<8x128xf32>
    %c8_i32_130 = arith.constant 8 : i32
    %339 = arith.muli %c7_i32, %c8_i32_130 : i32
    %340 = tpu.assume_multiple %339, 8 : i32
    %341 = arith.index_cast %340 : i32 to index
    %c0_131 = arith.constant 0 : index
    %342 = vector.load %arg12[%341, %c0_131] : memref<64x512xf32, #tpu.memory_space<vmem>>, vector<8x512xf32>
    %343 = arith.truncf %337 : vector<8x128xf32> to vector<8x128xbf16>
    %cst_132 = arith.constant dense<0.000000e+00> : vector<8x512xf32>
    %344 = tpu.matmul %343, %12, %cst_132 {dimension_numbers = #tpu.dot_dimension_numbers<[1], [0], [0], [1], [0, 0, 1, 1], [], []>} : vector<8x128xbf16>, vector<128x512xbf16>, vector<8x512xf32> -> vector<8x512xf32>
    %345 = arith.addf %342, %344 : vector<8x512xf32>
    %346 = vector.extract_strided_slice %345 {offsets = [0, 0], sizes = [8, 384], strides = [1, 1]} : vector<8x512xf32> to vector<8x384xf32>
    %347 = arith.negf %346 : vector<8x384xf32>
    %348 = math.exp %347 : vector<8x384xf32>
    %cst_133 = arith.constant 1.000000e+00 : f32
    %349 = vector.broadcast %cst_133 : f32 to vector<8x384xf32>
    %350 = arith.addf %349, %348 : vector<8x384xf32>
    %351 = arith.divf %349, %350 : vector<8x384xf32>
    %352 = vector.extract_strided_slice %351 {offsets = [0, 0], sizes = [8, 128], strides = [1, 1]} : vector<8x384xf32> to vector<8x128xf32>
    %353 = vector.extract_strided_slice %351 {offsets = [0, 128], sizes = [8, 128], strides = [1, 1]} : vector<8x384xf32> to vector<8x128xf32>
    %354 = vector.extract_strided_slice %351 {offsets = [0, 256], sizes = [8, 128], strides = [1, 1]} : vector<8x384xf32> to vector<8x128xf32>
    %355 = vector.extract_strided_slice %345 {offsets = [0, 384], sizes = [8, 128], strides = [1, 1]} : vector<8x512xf32> to vector<8x128xf32>
    %356 = math.tanh %355 : vector<8x128xf32>
    %357 = arith.mulf %353, %338 : vector<8x128xf32>
    %358 = arith.mulf %352, %356 : vector<8x128xf32>
    %359 = arith.addf %357, %358 : vector<8x128xf32>
    %360 = math.tanh %359 : vector<8x128xf32>
    %361 = arith.mulf %354, %360 : vector<8x128xf32>
    %362 = vector.broadcast %336 : i32 to vector<8x1xi32>
    %363 = arith.cmpi slt, %362, %11 : vector<8x1xi32>
    %364 = vector.shape_cast %363 : vector<8x1xi1> to vector<8x1xi1>
    %365 = vector.broadcast %364 : vector<8x1xi1> to vector<8x128xi1>
    %366 = arith.select %365, %361, %337 : vector<8x128xi1>, vector<8x128xf32>
    %c0_134 = arith.constant 0 : index
    %c0_135 = arith.constant 0 : index
    %367 = vector.load %arg10[%c0_134, %c0_135] : memref<8x128xf32, #tpu.memory_space<vmem>>, vector<8x128xf32>
    tpu.vector_store %arg10[%c0_134, %c0_135], %366 {strides = array<i32>} : memref<8x128xf32, #tpu.memory_space<vmem>>, vector<8x128xf32>,
    %368 = vector.shape_cast %363 : vector<8x1xi1> to vector<8x1xi1>
    %369 = vector.broadcast %368 : vector<8x1xi1> to vector<8x128xi1>
    %370 = arith.select %369, %359, %338 : vector<8x128xi1>, vector<8x128xf32>
    %c0_136 = arith.constant 0 : index
    %c0_137 = arith.constant 0 : index
    %371 = vector.load %arg11[%c0_136, %c0_137] : memref<8x128xf32, #tpu.memory_space<vmem>>, vector<8x128xf32>
    tpu.vector_store %arg11[%c0_136, %c0_137], %370 {strides = array<i32>} : memref<8x128xf32, #tpu.memory_space<vmem>>, vector<8x128xf32>,
    %cst_138 = arith.constant 0.000000e+00 : f32
    %372 = vector.shape_cast %363 : vector<8x1xi1> to vector<8x1xi1>
    %373 = vector.broadcast %372 : vector<8x1xi1> to vector<8x128xi1>
    %374 = vector.broadcast %cst_138 : f32 to vector<8x128xf32>
    %375 = arith.select %373, %361, %374 : vector<8x128xi1>, vector<8x128xf32>
    %376 = arith.truncf %375 : vector<8x128xf32> to vector<8x128xbf16>
    %377 = arith.index_cast %c7_i32 : i32 to index
    %c0_139 = arith.constant 0 : index
    %c0_140 = arith.constant 0 : index
    %378 = vector.load %arg7[%377, %c0_139, %c0_140] : memref<8x8x128xbf16, #tpu.memory_space<vmem>>, vector<1x8x128xbf16>
    %379 = vector.shape_cast %378 : vector<1x8x128xbf16> to vector<8x128xbf16>
    %380 = vector.shape_cast %376 : vector<8x128xbf16> to vector<1x8x128xbf16>
    tpu.vector_store %arg7[%377, %c0_139, %c0_140], %380 {strides = array<i32>} : memref<8x8x128xbf16, #tpu.memory_space<vmem>>, vector<1x8x128xbf16>,
    %c8_i32_141 = arith.constant 8 : i32
    %c0_i32_142 = arith.constant 0 : i32
    %381 = arith.cmpi eq, %arg0, %c0_i32_142 : i32
    %382 = arith.extui %381 : i1 to i32
    %c0_i32_143 = arith.constant 0 : i32
    %383 = arith.cmpi ne, %382, %c0_i32_143 : i32
    scf.if %383 {
      %c0_144 = arith.constant 0 : index
      %c0_145 = arith.constant 0 : index
      %384 = vector.load %arg10[%c0_144, %c0_145] : memref<8x128xf32, #tpu.memory_space<vmem>>, vector<8x128xf32>
      %c0_146 = arith.constant 0 : index
      %c0_147 = arith.constant 0 : index
      %385 = vector.load %arg8[%c0_146, %c0_147] : memref<8x128xf32, #tpu.memory_space<vmem>>, vector<8x128xf32>
      tpu.vector_store %arg8[%c0_146, %c0_147], %384 {strides = array<i32>} : memref<8x128xf32, #tpu.memory_space<vmem>>, vector<8x128xf32>,
      %c0_148 = arith.constant 0 : index
      %c0_149 = arith.constant 0 : index
      %386 = vector.load %arg11[%c0_148, %c0_149] : memref<8x128xf32, #tpu.memory_space<vmem>>, vector<8x128xf32>
      %c0_150 = arith.constant 0 : index
      %c0_151 = arith.constant 0 : index
      %387 = vector.load %arg9[%c0_150, %c0_151] : memref<8x128xf32, #tpu.memory_space<vmem>>, vector<8x128xf32>
      tpu.vector_store %arg9[%c0_150, %c0_151], %386 {strides = array<i32>} : memref<8x128xf32, #tpu.memory_space<vmem>>, vector<8x128xf32>,
    } else {
    }
    return
  }
  func.func @transform_0(%arg0: i32) -> (i32, i32, i32) {
    %c0_i32 = arith.constant 0 : i32
    %c0_i32_0 = arith.constant 0 : i32
    %c0_i32_1 = arith.constant 0 : i32
    return %arg0, %c0_i32, %c0_i32_0 : i32, i32, i32
  }
  func.func @transform_1(%arg0: i32) -> (i32, i32) {
    %c0_i32 = arith.constant 0 : i32
    %c0_i32_0 = arith.constant 0 : i32
    %c0_i32_1 = arith.constant 0 : i32
    return %c0_i32, %c0_i32_0 : i32, i32
  }
  func.func @transform_2(%arg0: i32) -> (i32, i32) {
    %c0_i32 = arith.constant 0 : i32
    %c0_i32_0 = arith.constant 0 : i32
    %c0_i32_1 = arith.constant 0 : i32
    return %c0_i32, %c0_i32_0 : i32, i32
  }
  func.func @transform_3(%arg0: i32) -> (i32, i32) {
    %c0_i32 = arith.constant 0 : i32
    %c0_i32_0 = arith.constant 0 : i32
    %c0_i32_1 = arith.constant 0 : i32
    return %c0_i32, %c0_i32_0 : i32, i32
  }
  func.func @transform_4(%arg0: i32) -> (i32, i32) {
    %c0_i32 = arith.constant 0 : i32
    %c0_i32_0 = arith.constant 0 : i32
    %c0_i32_1 = arith.constant 0 : i32
    return %c0_i32, %c0_i32_0 : i32, i32
  }
  func.func @transform_5(%arg0: i32) -> (i32, i32) {
    %c0_i32 = arith.constant 0 : i32
    %c0_i32_0 = arith.constant 0 : i32
    %c0_i32_1 = arith.constant 0 : i32
    return %c0_i32, %c0_i32_0 : i32, i32
  }
  func.func @transform_6(%arg0: i32) -> (i32, i32, i32) {
    %c0_i32 = arith.constant 0 : i32
    %c0_i32_0 = arith.constant 0 : i32
    %c0_i32_1 = arith.constant 0 : i32
    return %arg0, %c0_i32, %c0_i32_0 : i32, i32, i32
  }
  func.func @transform_7(%arg0: i32) -> (i32, i32) {
    %c0_i32 = arith.constant 0 : i32
    %c0_i32_0 = arith.constant 0 : i32
    %c0_i32_1 = arith.constant 0 : i32
    return %c0_i32, %c0_i32_0 : i32, i32
  }
  func.func @transform_8(%arg0: i32) -> (i32, i32) {
    %c0_i32 = arith.constant 0 : i32
    %c0_i32_0 = arith.constant 0 : i32
    %c0_i32_1 = arith.constant 0 : i32
    return %c0_i32, %c0_i32_0 : i32, i32
  }
}

module attributes {stable_mosaic.version = 11 : i64} {
  func.func @output_proj_kernel(%arg0: i32, %arg1: i32, %arg2: memref<64x128xbf16, #tpu.memory_space<vmem>>, %arg3: memref<128x128xbf16, #tpu.memory_space<vmem>>, %arg4: memref<1x128xf32, #tpu.memory_space<vmem>>, %arg5: memref<64x128xf32, #tpu.memory_space<vmem>>) attributes {dimension_semantics = [#tpu.dimension_semantics<parallel>, #tpu.dimension_semantics<parallel>], iteration_bounds = array<i64: 1, 1>, scalar_prefetch = 0 : i64, scratch_operands = 0 : i64, tpu.core_type = #tpu.core_type<tc>, window_params = [{transform_indices = @transform_0, window_bounds = array<i64: 64, 128>}, {transform_indices = @transform_1, window_bounds = array<i64: 128, 128>}, {transform_indices = @transform_2, window_bounds = array<i64: 1, 128>}, {transform_indices = @transform_3, window_bounds = array<i64: 64, 128>}]} {
    %c0 = arith.constant 0 : index
    %c0_0 = arith.constant 0 : index
    %0 = vector.load %arg2[%c0, %c0_0] : memref<64x128xbf16, #tpu.memory_space<vmem>>, vector<64x128xbf16>
    %c0_1 = arith.constant 0 : index
    %c0_2 = arith.constant 0 : index
    %1 = vector.load %arg3[%c0_1, %c0_2] : memref<128x128xbf16, #tpu.memory_space<vmem>>, vector<128x128xbf16>
    %cst = arith.constant dense<0.000000e+00> : vector<64x128xf32>
    %2 = tpu.matmul %0, %1, %cst {dimension_numbers = #tpu.dot_dimension_numbers<[1], [0], [0], [1], [0, 0, 1, 1], [], []>} : vector<64x128xbf16>, vector<128x128xbf16>, vector<64x128xf32> -> vector<64x128xf32>
    %c0_3 = arith.constant 0 : index
    %c0_4 = arith.constant 0 : index
    %3 = vector.load %arg4[%c0_3, %c0_4] : memref<1x128xf32, #tpu.memory_space<vmem>>, vector<1x128xf32>
    %4 = vector.broadcast %3 : vector<1x128xf32> to vector<64x128xf32>
    %5 = arith.addf %2, %4 : vector<64x128xf32>
    %c0_5 = arith.constant 0 : index
    %c0_6 = arith.constant 0 : index
    %6 = vector.load %arg5[%c0_5, %c0_6] : memref<64x128xf32, #tpu.memory_space<vmem>>, vector<64x128xf32>
    tpu.vector_store %arg5[%c0_5, %c0_6], %5 {strides = array<i32>} : memref<64x128xf32, #tpu.memory_space<vmem>>, vector<64x128xf32>,
    return
  }
  func.func @transform_0(%arg0: i32, %arg1: i32) -> (i32, i32) {
    %c0_i32 = arith.constant 0 : i32
    %c0_i32_0 = arith.constant 0 : i32
    return %arg1, %c0_i32 : i32, i32
  }
  func.func @transform_1(%arg0: i32, %arg1: i32) -> (i32, i32) {
    %c0_i32 = arith.constant 0 : i32
    %c0_i32_0 = arith.constant 0 : i32
    return %c0_i32, %arg0 : i32, i32
  }
  func.func @transform_2(%arg0: i32, %arg1: i32) -> (i32, i32) {
    %c0_i32 = arith.constant 0 : i32
    %c0_i32_0 = arith.constant 0 : i32
    return %c0_i32, %arg0 : i32, i32
  }
  func.func @transform_3(%arg0: i32, %arg1: i32) -> (i32, i32) {
    %c0_i32 = arith.constant 0 : i32
    return %arg1, %arg0 : i32, i32
  }
}

</mosaic_0001>

<llo_original>
// kernel: decoder_forward.3
$region0: #{decoder_forward.3}
  #allocation0 [shape = 'u32[]', space=smem, size = 0x4, offset = 0x4, fixed_abs, tag = 'smem constant byte address 0x4 - core index']
  #allocation1 [shape = 'u32[144,128]{1,0:T(1,128)}', space=vmem, size = 0x12000, scoped, tag = 'internal scratch']
  %s0 = inlined_call_operand.vmem [shape: bf16[64,128], index: 0, kind: input, shape index: {}]
  %s1 = inlined_call_operand.vmem [shape: bf16[128,128], index: 1, kind: input, shape index: {}]
  %s2 = inlined_call_operand.vmem [shape: f32[1,128], index: 2, kind: input, shape index: {}]
  %s3 = inlined_call_operand.vmem [shape: f32[64,128], index: 3, kind: output, shape index: {}]
  %s4 = sld [smem:[#allocation0]]
  $region22: #{decoder_forward.3} parent=0
    _
  %s6 = ssub.s32 1, %s4
  %s7 = scalar_select 0, %s6, %s4
  // Predicated region
  $region2: #{decoder_forward.3} parent=0 // pred_check
    _
  $region3: #{decoder_forward.3} parent=0 // pred_check_branch
    %9 = sbr.rel (0) target = $region5
  $region4: #{decoder_forward.3} parent=0 // pred_region
    _
  $region5: #{decoder_forward.3} parent=0 // pred_fallthru
    _
  // Predicated region
  $region6: #{decoder_forward.3} parent=0 // pred_check
    _
  $region7: #{decoder_forward.3} parent=0 // pred_check_branch
    %11 = sbr.rel (0) target = $region9
  $region8: #{decoder_forward.3} parent=0 // pred_region
    _
  $region9: #{decoder_forward.3} parent=0 // pred_fallthru
    _
  // Predicated region
  $region10: #{decoder_forward.3} parent=0 // pred_check
    _
  $region11: #{decoder_forward.3} parent=0 // pred_check_branch
    %13 = sbr.rel (0) target = $region13
  $region12: #{decoder_forward.3} parent=0 // pred_region
    _
  $region13: #{decoder_forward.3} parent=0 // pred_fallthru
    _
  %v15 = vld [vmem:[%s0] sm:$0xf]
  %v16 = vld [vmem:[%s0 + $0x4] sm:$0xf]
  %v17 = vld [vmem:[%s0 + $0x8] sm:$0xf]
  %v18 = vld [vmem:[%s0 + $0xc] sm:$0xf]
  %v19 = vld [vmem:[%s0 + $0x10] sm:$0xf]
  %v20 = vld [vmem:[%s0 + $0x14] sm:$0xf]
  %v21 = vld [vmem:[%s0 + $0x18] sm:$0xf]
  %v22 = vld [vmem:[%s0 + $0x1c] sm:$0xf]
  %v23 = vld [vmem:[%s1] sm:$0xf]
  %v24 = vld [vmem:[%s1 + $0x4] sm:$0xf]
  %v25 = vld [vmem:[%s1 + $0x8] sm:$0xf]
  %v26 = vld [vmem:[%s1 + $0xc] sm:$0xf]
  %v27 = vld [vmem:[%s1 + $0x10] sm:$0xf]
  %v28 = vld [vmem:[%s1 + $0x14] sm:$0xf]
  %v29 = vld [vmem:[%s1 + $0x18] sm:$0xf]
  %v30 = vld [vmem:[%s1 + $0x1c] sm:$0xf]
  %v31 = vld [vmem:[%s1 + $0x20] sm:$0xf]
  %v32 = vld [vmem:[%s1 + $0x24] sm:$0xf]
  %v33 = vld [vmem:[%s1 + $0x28] sm:$0xf]
  %v34 = vld [vmem:[%s1 + $0x2c] sm:$0xf]
  %v35 = vld [vmem:[%s1 + $0x30] sm:$0xf]
  %v36 = vld [vmem:[%s1 + $0x34] sm:$0xf]
  %v37 = vld [vmem:[%s1 + $0x38] sm:$0xf]
  %v38 = vld [vmem:[%s1 + $0x3c] sm:$0xf]
  %v39 = vld [vmem:[%s2] sm:$0x1]
  %v41 = vlaneseq
  %v42 = vshrl.u32 %v41, 7
  %v43 = vsub.s32 0, %v42
  %v44 = vrot.slane %v39, %v43
  %v54 = vunpack.c.l.b16 %v15
  %v55 = vunpack.c.l.b16 %v16
  %v56 = vunpack.c.l.b16 %v17
  %v57 = vunpack.c.l.b16 %v18
  %v58 = vunpack.c.l.b16 %v19
  %v59 = vunpack.c.l.b16 %v20
  %v60 = vunpack.c.l.b16 %v21
  %v61 = vunpack.c.l.b16 %v22
  %v62 = vpack.c.b16 %v55, %v54
  %v63 = vpack.c.b16 %v57, %v56
  %v64 = vpack.c.b16 %v59, %v58
  %v65 = vpack.c.b16 %v61, %v60
  %v86 = vunpack.c.l.b16 %v23
  %v87 = vunpack.c.l.b16 %v24
  %v88 = vunpack.c.l.b16 %v25
  %v89 = vunpack.c.l.b16 %v26
  %v90 = vunpack.c.l.b16 %v27
  %v91 = vunpack.c.l.b16 %v28
  %v92 = vunpack.c.l.b16 %v29
  %v93 = vunpack.c.l.b16 %v30
  %v94 = vunpack.c.l.b16 %v31
  %v95 = vunpack.c.l.b16 %v32
  %v96 = vunpack.c.l.b16 %v33
  %v97 = vunpack.c.l.b16 %v34
  %v98 = vunpack.c.l.b16 %v35
  %v99 = vunpack.c.l.b16 %v36
  %v100 = vunpack.c.l.b16 %v37
  %v101 = vunpack.c.l.b16 %v38
  %v102 = vpack.c.b16 %v87, %v86
  %v103 = vpack.c.b16 %v89, %v88
  %v104 = vpack.c.b16 %v91, %v90
  %v105 = vpack.c.b16 %v93, %v92
  %v106 = vpack.c.b16 %v95, %v94
  %v107 = vpack.c.b16 %v97, %v96
  %v108 = vpack.c.b16 %v99, %v98
  %v109 = vpack.c.b16 %v101, %v100
  %118 = vmatprep.subr.bf16.mxu0 0
  %119 = vmatpush1.bf16.msra.mxu0 %v102
  %120 = vmatprep.subr.bf16.mxu0 0
  %121 = vmatpush1.bf16.msra.mxu0 %v103
  %122 = vmatprep.subr.bf16.mxu0 0
  %123 = vmatpush1.bf16.msra.mxu0 %v104
  %124 = vmatprep.subr.bf16.mxu0 0
  %125 = vmatpush1.bf16.msra.mxu0 %v105
  %126 = vmatprep.subr.bf16.mxu0 0
  %127 = vmatpush1.bf16.msra.mxu0 %v106
  %128 = vmatprep.subr.bf16.mxu0 0
  %129 = vmatpush1.bf16.msra.mxu0 %v107
  %130 = vmatprep.subr.bf16.mxu0 0
  %131 = vmatpush1.bf16.msra.mxu0 %v108
  %132 = vmatprep.subr.bf16.mxu0 0
  %133 = vmatpush1.bf16.msra.mxu0 %v109
  %134 = vmatprep.subr.bf16.mxu0 0
  %135 = vmatpush1.bf16.msra.mxu0 0
  %136 = vmatprep.subr.bf16.mxu0 0
  %137 = vmatpush1.bf16.msra.mxu0 0
  %138 = vmatprep.subr.bf16.mxu0 0
  %139 = vmatpush1.bf16.msra.mxu0 0
  %140 = vmatprep.subr.bf16.mxu0 0
  %141 = vmatpush1.bf16.msra.mxu0 0
  %142 = vmatprep.subr.bf16.mxu0 0
  %143 = vmatpush1.bf16.msra.mxu0 0
  %144 = vmatprep.subr.bf16.mxu0 0
  %145 = vmatpush1.bf16.msra.mxu0 0
  %146 = vmatprep.subr.bf16.mxu0 0
  %147 = vmatpush1.bf16.msra.mxu0 0
  %148 = vmatprep.subr.bf16.mxu0 0
  %149 = vmatpush1.bf16.msra.mxu0 0
  %150 = vmatprep.mubr.bf16.mxu0 0
  %151 = vmatmul.mubr.bf16.gmra.mrb[0].mxu0 %v62
  %v152 = vpop.f32.mrb[0].mxu0
  %v153 = vadd.f32 %v44, %v152
  %v154 = vpop.f32.mrb[0].mxu0
  %v155 = vpop.f32.mrb[0].mxu0
  %v156 = vadd.f32 %v44, %v155
  %v157 = vpop.f32.mrb[0].mxu0
  %158 = vmatprep.mubr.bf16.mxu0 0
  %159 = vmatmul.mubr.bf16.gmra.mrb[0].mxu0 %v63
  %v160 = vpop.f32.mrb[0].mxu0
  %v161 = vadd.f32 %v44, %v160
  %v162 = vpop.f32.mrb[0].mxu0
  %v163 = vpop.f32.mrb[0].mxu0
  %v164 = vadd.f32 %v44, %v163
  %v165 = vpop.f32.mrb[0].mxu0
  %166 = vmatprep.mubr.bf16.mxu0 0
  %167 = vmatmul.mubr.bf16.gmra.mrb[0].mxu0 %v64
  %v168 = vpop.f32.mrb[0].mxu0
  %v169 = vadd.f32 %v44, %v168
  %v170 = vpop.f32.mrb[0].mxu0
  %v171 = vpop.f32.mrb[0].mxu0
  %v172 = vadd.f32 %v44, %v171
  %v173 = vpop.f32.mrb[0].mxu0
  %174 = vmatprep.mubr.bf16.mxu0 0
  %175 = vmatmul.mubr.bf16.gmra.mrb[0].mxu0 %v65
  %v176 = vpop.f32.mrb[0].mxu0
  %v177 = vadd.f32 %v44, %v176
  %v178 = vpop.f32.mrb[0].mxu0
  %v179 = vpop.f32.mrb[0].mxu0
  %v180 = vadd.f32 %v44, %v179
  %v181 = vpop.f32.mrb[0].mxu0
  %182 = vdwg.mxu0
  %183 = vst [vmem:[%s3] sm:$0xff] %v153
  %184 = vst [vmem:[%s3 + $0x8] sm:$0xff] %v156
  %185 = vst [vmem:[%s3 + $0x10] sm:$0xff] %v161
  %186 = vst [vmem:[%s3 + $0x18] sm:$0xff] %v164
  %187 = vst [vmem:[%s3 + $0x20] sm:$0xff] %v169
  %188 = vst [vmem:[%s3 + $0x28] sm:$0xff] %v172
  %189 = vst [vmem:[%s3 + $0x30] sm:$0xff] %v177
  %190 = vst [vmem:[%s3 + $0x38] sm:$0xff] %v180
  // Predicated region
  $region14: #{decoder_forward.3} parent=0 // pred_check
    _
  $region15: #{decoder_forward.3} parent=0 // pred_check_branch
    %192 = sbr.rel (0) target = $region17
  $region16: #{decoder_forward.3} parent=0 // pred_region
    _
  $region17: #{decoder_forward.3} parent=0 // pred_fallthru
    _
  // Predicated region
  $region18: #{decoder_forward.3} parent=0 // pred_check
    _
  $region19: #{decoder_forward.3} parent=0 // pred_check_branch
    %194 = sbr.rel (0) target = $region21
  $region20: #{decoder_forward.3} parent=0 // pred_region
    _
  $region21: #{decoder_forward.3} parent=0 // pred_fallthru
    _

// kernel: decoder_forward.2
$region0: #{decoder_forward.2}
  #allocation0 [shape = 'u32[]', space=smem, size = 0x4, offset = 0x4, fixed_abs, tag = 'smem constant byte address 0x4 - core index']
  #allocation1 [shape = 'u32[144,128]{1,0:T(1,128)}', space=vmem, size = 0x12000, scoped, tag = 'internal scratch']
  #allocation2 [shape = 'f32[8,128]{1,0:T(8,128)}', space=vmem, size = 0x1000, scoped, tag = 'scratch operand']
  #allocation3 [shape = 'f32[8,128]{1,0:T(8,128)}', space=vmem, size = 0x1000, scoped, tag = 'scratch operand']
  #allocation4 [shape = 'f32[64,512]{1,0:T(8,128)}', space=vmem, size = 0x20000, scoped, tag = 'scratch operand']
  %s0 = inlined_call_operand.vmem [shape: bf16[8,8,128], index: 0, kind: input, shape index: {}]
  %s1 = inlined_call_operand.vmem [shape: f32[8,128], index: 1, kind: input, shape index: {}]
  %s2 = inlined_call_operand.vmem [shape: bf16[128,512], index: 2, kind: input, shape index: {}]
  %s3 = inlined_call_operand.vmem [shape: bf16[128,512], index: 3, kind: input, shape index: {}]
  %s4 = inlined_call_operand.vmem [shape: f32[1,512], index: 4, kind: input, shape index: {}]
  %s5 = inlined_call_operand.vmem [shape: s32[8,1], index: 5, kind: input, shape index: {}]
  %s6 = inlined_call_operand.vmem [shape: bf16[8,8,128], index: 6, kind: output, shape index: {0}]
  %s7 = inlined_call_operand.vmem [shape: f32[8,128], index: 7, kind: output, shape index: {1}]
  %s8 = inlined_call_operand.vmem [shape: f32[8,128], index: 8, kind: output, shape index: {2}]
  %9 = xla_tuple %s6, %s7, %s8
  %s10 = sld [smem:[#allocation0]]
  $region58: #{decoder_forward.2} parent=0
    _
  %s12 = ssub.s32 1, %s10
  %s13 = scalar_select 0, %s12, %s10
  // Predicated region
  $region2: #{decoder_forward.2} parent=0 // pred_check
    _
  $region3: #{decoder_forward.2} parent=0 // pred_check_branch
    %15 = sbr.rel (0) target = $region5
  $region4: #{decoder_forward.2} parent=0 // pred_region
    _
  $region5: #{decoder_forward.2} parent=0 // pred_fallthru
    _
  // Predicated region
  $region6: #{decoder_forward.2} parent=0 // pred_check
    _
  $region7: #{decoder_forward.2} parent=0 // pred_check_branch
    %17 = sbr.rel (0) target = $region9
  $region8: #{decoder_forward.2} parent=0 // pred_region
    _
  $region9: #{decoder_forward.2} parent=0 // pred_fallthru
    _
  // Predicated region
  $region10: #{decoder_forward.2} parent=0 // pred_check
    _
  $region11: #{decoder_forward.2} parent=0 // pred_check_branch
    %19 = sbr.rel (0) target = $region13
  $region12: #{decoder_forward.2} parent=0 // pred_region
    _
  $region13: #{decoder_forward.2} parent=0 // pred_fallthru
    _
  // Predicated region
  $region14: #{decoder_forward.2} parent=0 // pred_check
    _
  $region15: #{decoder_forward.2} parent=0 // pred_check_branch
    %21 = sbr.rel (0) target = $region17
  $region16: #{decoder_forward.2} parent=0 // pred_region
    _
  $region17: #{decoder_forward.2} parent=0 // pred_fallthru
    _
  // Predicated region
  $region18: #{decoder_forward.2} parent=0 // pred_check
    _
  $region19: #{decoder_forward.2} parent=0 // pred_check_branch
    %23 = sbr.rel (0) target = $region21
  $region20: #{decoder_forward.2} parent=0 // pred_region
    _
  $region21: #{decoder_forward.2} parent=0 // pred_fallthru
    _
  // Predicated region
  $region22: #{decoder_forward.2} parent=0 // pred_check
    _
  $region23: #{decoder_forward.2} parent=0 // pred_check_branch
    %25 = sbr.rel (0) target = $region25
  $region24: #{decoder_forward.2} parent=0 // pred_region
    _
  $region25: #{decoder_forward.2} parent=0 // pred_fallthru
    _
  %p27 = scmp.eq.s32.totalorder 0, 0
  // Predicated region
  $region26: #{decoder_forward.2} parent=0 // pred_check
    %p28 = pneg %p27
  $region27: #{decoder_forward.2} parent=0 // pred_check_branch
    %30 = sbr.rel (%p28) target = $region29
  $region28: #{decoder_forward.2} parent=0 // pred_region
    %31 = vst [vmem:[#allocation2] sm:$0xff] 0.0
    %v32 = vld [vmem:[%s1] sm:$0xff]
    %33 = vst [vmem:[#allocation3] sm:$0xff] %v32
  $region29: #{decoder_forward.2} parent=0 // pred_fallthru
    _
  %v34 = vld [vmem:[%s0] sm:$0xf]
  %v35 = vld [vmem:[%s0 + $0x4] sm:$0xf]
  %v36 = vld [vmem:[%s0 + $0x8] sm:$0xf]
  %v37 = vld [vmem:[%s0 + $0xc] sm:$0xf]
  %v38 = vld [vmem:[%s0 + $0x10] sm:$0xf]
  %v39 = vld [vmem:[%s0 + $0x14] sm:$0xf]
  %v40 = vld [vmem:[%s0 + $0x18] sm:$0xf]
  %v41 = vld [vmem:[%s0 + $0x1c] sm:$0xf]
  %v42 = vld [vmem:[%s2] sm:$0xff]
  %v43 = vld [vmem:[%s2 + $0x8] sm:$0xff]
  %v44 = vld [vmem:[%s2 + $0x10] sm:$0xff]
  %v45 = vld [vmem:[%s2 + $0x18] sm:$0xff]
  %v46 = vld [vmem:[%s2 + $0x20] sm:$0xff]
  %v47 = vld [vmem:[%s2 + $0x28] sm:$0xff]
  %v48 = vld [vmem:[%s2 + $0x30] sm:$0xff]
  %v49 = vld [vmem:[%s2 + $0x38] sm:$0xff]
  %v50 = vld [vmem:[%s2 + $0x40] sm:$0xff]
  %v51 = vld [vmem:[%s2 + $0x48] sm:$0xff]
  %v52 = vld [vmem:[%s2 + $0x50] sm:$0xff]
  %v53 = vld [vmem:[%s2 + $0x58] sm:$0xff]
  %v54 = vld [vmem:[%s2 + $0x60] sm:$0xff]
  %v55 = vld [vmem:[%s2 + $0x68] sm:$0xff]
  %v56 = vld [vmem:[%s2 + $0x70] sm:$0xff]
  %v57 = vld [vmem:[%s2 + $0x78] sm:$0xff]
  %v58 = vld [vmem:[%s2 + $0x80] sm:$0xff]
  %v59 = vld [vmem:[%s2 + $0x88] sm:$0xff]
  %v60 = vld [vmem:[%s2 + $0x90] sm:$0xff]
  %v61 = vld [vmem:[%s2 + $0x98] sm:$0xff]
  %v62 = vld [vmem:[%s2 + $0xa0] sm:$0xff]
  %v63 = vld [vmem:[%s2 + $0xa8] sm:$0xff]
  %v64 = vld [vmem:[%s2 + $0xb0] sm:$0xff]
  %v65 = vld [vmem:[%s2 + $0xb8] sm:$0xff]
  %v66 = vld [vmem:[%s2 + $0xc0] sm:$0xff]
  %v67 = vld [vmem:[%s2 + $0xc8] sm:$0xff]
  %v68 = vld [vmem:[%s2 + $0xd0] sm:$0xff]
  %v69 = vld [vmem:[%s2 + $0xd8] sm:$0xff]
  %v70 = vld [vmem:[%s2 + $0xe0] sm:$0xff]
  %v71 = vld [vmem:[%s2 + $0xe8] sm:$0xff]
  %v72 = vld [vmem:[%s2 + $0xf0] sm:$0xff]
  %v73 = vld [vmem:[%s2 + $0xf8] sm:$0xff]
  %v74 = vld [vmem:[%s4] sm:$0xf]
  %v76 = vlaneseq
  %v77 = vshrl.u32 %v76, 7
  %v78 = vsub.s32 0, %v77
  %v79 = vrot.slane %v74, %v78
  %v80 = vlaneseq
  %v81 = vshrl.u32 %v80, 7
  %v82 = vsub.s32 1, %v81
  %v83 = vrot.slane %v74, %v82
  %v84 = vlaneseq
  %v85 = vshrl.u32 %v84, 7
  %v86 = vsub.s32 2, %v85
  %v87 = vrot.slane %v74, %v86
  %v88 = vlaneseq
  %v89 = vshrl.u32 %v88, 7
  %v90 = vsub.s32 3, %v89
  %v91 = vrot.slane %v74, %v90
  %v104 = vunpack.c.l.b16 %v34
  %v105 = vunpack.c.l.b16 %v35
  %v106 = vunpack.c.l.b16 %v36
  %v107 = vunpack.c.l.b16 %v37
  %v108 = vunpack.c.l.b16 %v38
  %v109 = vunpack.c.l.b16 %v39
  %v110 = vunpack.c.l.b16 %v40
  %v111 = vunpack.c.l.b16 %v41
  %v112 = vpack.c.b16 %v105, %v104
  %v113 = vpack.c.b16 %v107, %v106
  %v114 = vpack.c.b16 %v109, %v108
  %v115 = vpack.c.b16 %v111, %v110
  %v152 = vunpack.c.l.b16 %v42
  %v153 = vunpack.c.h.b16 %v42
  %v154 = vunpack.c.l.b16 %v43
  %v155 = vunpack.c.h.b16 %v43
  %v156 = vunpack.c.l.b16 %v44
  %v157 = vunpack.c.h.b16 %v44
  %v158 = vunpack.c.l.b16 %v45
  %v159 = vunpack.c.h.b16 %v45
  %v160 = vunpack.c.l.b16 %v46
  %v161 = vunpack.c.h.b16 %v46
  %v162 = vunpack.c.l.b16 %v47
  %v163 = vunpack.c.h.b16 %v47
  %v164 = vunpack.c.l.b16 %v48
  %v165 = vunpack.c.h.b16 %v48
  %v166 = vunpack.c.l.b16 %v49
  %v167 = vunpack.c.h.b16 %v49
  %v168 = vunpack.c.l.b16 %v50
  %v169 = vunpack.c.h.b16 %v50
  %v170 = vunpack.c.l.b16 %v51
  %v171 = vunpack.c.h.b16 %v51
  %v172 = vunpack.c.l.b16 %v52
  %v173 = vunpack.c.h.b16 %v52
  %v174 = vunpack.c.l.b16 %v53
  %v175 = vunpack.c.h.b16 %v53
  %v176 = vunpack.c.l.b16 %v54
  %v177 = vunpack.c.h.b16 %v54
  %v178 = vunpack.c.l.b16 %v55
  %v179 = vunpack.c.h.b16 %v55
  %v180 = vunpack.c.l.b16 %v56
  %v181 = vunpack.c.h.b16 %v56
  %v182 = vunpack.c.l.b16 %v57
  %v183 = vunpack.c.h.b16 %v57
  %v184 = vunpack.c.l.b16 %v58
  %v185 = vunpack.c.h.b16 %v58
  %v186 = vunpack.c.l.b16 %v59
  %v187 = vunpack.c.h.b16 %v59
  %v188 = vunpack.c.l.b16 %v60
  %v189 = vunpack.c.h.b16 %v60
  %v190 = vunpack.c.l.b16 %v61
  %v191 = vunpack.c.h.b16 %v61
  %v192 = vunpack.c.l.b16 %v62
  %v193 = vunpack.c.h.b16 %v62
  %v194 = vunpack.c.l.b16 %v63
  %v195 = vunpack.c.h.b16 %v63
  %v196 = vunpack.c.l.b16 %v64
  %v197 = vunpack.c.h.b16 %v64
  %v198 = vunpack.c.l.b16 %v65
  %v199 = vunpack.c.h.b16 %v65
  %v200 = vunpack.c.l.b16 %v66
  %v201 = vunpack.c.h.b16 %v66
  %v202 = vunpack.c.l.b16 %v67
  %v203 = vunpack.c.h.b16 %v67
  %v204 = vunpack.c.l.b16 %v68
  %v205 = vunpack.c.h.b16 %v68
  %v206 = vunpack.c.l.b16 %v69
  %v207 = vunpack.c.h.b16 %v69
  %v208 = vunpack.c.l.b16 %v70
  %v209 = vunpack.c.h.b16 %v70
  %v210 = vunpack.c.l.b16 %v71
  %v211 = vunpack.c.h.b16 %v71
  %v212 = vunpack.c.l.b16 %v72
  %v213 = vunpack.c.h.b16 %v72
  %v214 = vunpack.c.l.b16 %v73
  %v215 = vunpack.c.h.b16 %v73
  %v216 = vpack.c.b16 %v156, %v152
  %v217 = vpack.c.b16 %v157, %v153
  %v218 = vpack.c.b16 %v158, %v154
  %v219 = vpack.c.b16 %v159, %v155
  %v220 = vpack.c.b16 %v164, %v160
  %v221 = vpack.c.b16 %v165, %v161
  %v222 = vpack.c.b16 %v166, %v162
  %v223 = vpack.c.b16 %v167, %v163
  %v224 = vpack.c.b16 %v172, %v168
  %v225 = vpack.c.b16 %v173, %v169
  %v226 = vpack.c.b16 %v174, %v170
  %v227 = vpack.c.b16 %v175, %v171
  %v228 = vpack.c.b16 %v180, %v176
  %v229 = vpack.c.b16 %v181, %v177
  %v230 = vpack.c.b16 %v182, %v178
  %v231 = vpack.c.b16 %v183, %v179
  %v232 = vpack.c.b16 %v188, %v184
  %v233 = vpack.c.b16 %v189, %v185
  %v234 = vpack.c.b16 %v190, %v186
  %v235 = vpack.c.b16 %v191, %v187
  %v236 = vpack.c.b16 %v196, %v192
  %v237 = vpack.c.b16 %v197, %v193
  %v238 = vpack.c.b16 %v198, %v194
  %v239 = vpack.c.b16 %v199, %v195
  %v240 = vpack.c.b16 %v204, %v200
  %v241 = vpack.c.b16 %v205, %v201
  %v242 = vpack.c.b16 %v206, %v202
  %v243 = vpack.c.b16 %v207, %v203
  %v244 = vpack.c.b16 %v212, %v208
  %v245 = vpack.c.b16 %v213, %v209
  %v246 = vpack.c.b16 %v214, %v210
  %v247 = vpack.c.b16 %v215, %v211
  %280 = vmatprep.subr.bf16.mxu0 %v217
  %281 = vmatpush1.bf16.msra.mxu0 %v216
  %282 = vmatprep.subr.bf16.mxu0 %v221
  %283 = vmatpush1.bf16.msra.mxu0 %v220
  %284 = vmatprep.subr.bf16.mxu0 %v225
  %285 = vmatpush1.bf16.msra.mxu0 %v224
  %286 = vmatprep.subr.bf16.mxu0 %v229
  %287 = vmatpush1.bf16.msra.mxu0 %v228
  %288 = vmatprep.subr.bf16.mxu0 %v233
  %289 = vmatpush1.bf16.msra.mxu0 %v232
  %290 = vmatprep.subr.bf16.mxu0 %v237
  %291 = vmatpush1.bf16.msra.mxu0 %v236
  %292 = vmatprep.subr.bf16.mxu0 %v241
  %293 = vmatpush1.bf16.msra.mxu0 %v240
  %294 = vmatprep.subr.bf16.mxu0 %v245
  %295 = vmatpush1.bf16.msra.mxu0 %v244
  %296 = vmatprep.subr.bf16.mxu0 0
  %297 = vmatpush1.bf16.msra.mxu0 0
  %298 = vmatprep.subr.bf16.mxu0 0
  %299 = vmatpush1.bf16.msra.mxu0 0
  %300 = vmatprep.subr.bf16.mxu0 0
  %301 = vmatpush1.bf16.msra.mxu0 0
  %302 = vmatprep.subr.bf16.mxu0 0
  %303 = vmatpush1.bf16.msra.mxu0 0
  %304 = vmatprep.subr.bf16.mxu0 0
  %305 = vmatpush1.bf16.msra.mxu0 0
  %306 = vmatprep.subr.bf16.mxu0 0
  %307 = vmatpush1.bf16.msra.mxu0 0
  %308 = vmatprep.subr.bf16.mxu0 0
  %309 = vmatpush1.bf16.msra.mxu0 0
  %310 = vmatprep.subr.bf16.mxu0 0
  %311 = vmatpush1.bf16.msra.mxu0 0
  %312 = vmatprep.mubr.bf16.mxu0 0
  %313 = vmatmul.mubr.bf16.gmra.mrb[0].mxu0 %v112
  %v314 = vpop.f32.mrb[0].mxu0
  %v315 = vadd.f32 %v79, %v314
  %v316 = vpop.f32.mrb[0].mxu0
  %v317 = vadd.f32 %v83, %v316
  %v318 = vpop.f32.mrb[0].mxu0
  %v319 = vadd.f32 %v79, %v318
  %v320 = vpop.f32.mrb[0].mxu0
  %v321 = vadd.f32 %v83, %v320
  %322 = vmatprep.mubr.bf16.mxu0 0
  %323 = vmatmul.mubr.bf16.gmra.mrb[0].mxu0 %v113
  %v324 = vpop.f32.mrb[0].mxu0
  %v325 = vadd.f32 %v79, %v324
  %v326 = vpop.f32.mrb[0].mxu0
  %v327 = vadd.f32 %v83, %v326
  %v328 = vpop.f32.mrb[0].mxu0
  %v329 = vadd.f32 %v79, %v328
  %v330 = vpop.f32.mrb[0].mxu0
  %v331 = vadd.f32 %v83, %v330
  %332 = vmatprep.mubr.bf16.mxu0 0
  %333 = vmatmul.mubr.bf16.gmra.mrb[0].mxu0 %v114
  %v334 = vpop.f32.mrb[0].mxu0
  %v335 = vadd.f32 %v79, %v334
  %v336 = vpop.f32.mrb[0].mxu0
  %v337 = vadd.f32 %v83, %v336
  %v338 = vpop.f32.mrb[0].mxu0
  %v339 = vadd.f32 %v79, %v338
  %v340 = vpop.f32.mrb[0].mxu0
  %v341 = vadd.f32 %v83, %v340
  %342 = vmatprep.mubr.bf16.mxu0 0
  %343 = vmatmul.mubr.bf16.gmra.mrb[0].mxu0 %v115
  %v344 = vpop.f32.mrb[0].mxu0
  %v345 = vadd.f32 %v79, %v344
  %v346 = vpop.f32.mrb[0].mxu0
  %v347 = vadd.f32 %v83, %v346
  %v348 = vpop.f32.mrb[0].mxu0
  %v349 = vadd.f32 %v79, %v348
  %v350 = vpop.f32.mrb[0].mxu0
  %v351 = vadd.f32 %v83, %v350
  %352 = vdwg.mxu0
  %353 = vmatprep.subr.bf16.mxu0 %v219
  %354 = vmatpush1.bf16.msra.mxu0 %v218
  %355 = vmatprep.subr.bf16.mxu0 %v223
  %356 = vmatpush1.bf16.msra.mxu0 %v222
  %357 = vmatprep.subr.bf16.mxu0 %v227
  %358 = vmatpush1.bf16.msra.mxu0 %v226
  %359 = vmatprep.subr.bf16.mxu0 %v231
  %360 = vmatpush1.bf16.msra.mxu0 %v230
  %361 = vmatprep.subr.bf16.mxu0 %v235
  %362 = vmatpush1.bf16.msra.mxu0 %v234
  %363 = vmatprep.subr.bf16.mxu0 %v239
  %364 = vmatpush1.bf16.msra.mxu0 %v238
  %365 = vmatprep.subr.bf16.mxu0 %v243
  %366 = vmatpush1.bf16.msra.mxu0 %v242
  %367 = vmatprep.subr.bf16.mxu0 %v247
  %368 = vmatpush1.bf16.msra.mxu0 %v246
  %369 = vmatprep.subr.bf16.mxu0 0
  %370 = vmatpush1.bf16.msra.mxu0 0
  %371 = vmatprep.subr.bf16.mxu0 0
  %372 = vmatpush1.bf16.msra.mxu0 0
  %373 = vmatprep.subr.bf16.mxu0 0
  %374 = vmatpush1.bf16.msra.mxu0 0
  %375 = vmatprep.subr.bf16.mxu0 0
  %376 = vmatpush1.bf16.msra.mxu0 0
  %377 = vmatprep.subr.bf16.mxu0 0
  %378 = vmatpush1.bf16.msra.mxu0 0
  %379 = vmatprep.subr.bf16.mxu0 0
  %380 = vmatpush1.bf16.msra.mxu0 0
  %381 = vmatprep.subr.bf16.mxu0 0
  %382 = vmatpush1.bf16.msra.mxu0 0
  %383 = vmatprep.subr.bf16.mxu0 0
  %384 = vmatpush1.bf16.msra.mxu0 0
  %385 = vmatprep.mubr.bf16.mxu0 0
  %386 = vmatmul.mubr.bf16.gmra.mrb[0].mxu0 %v112
  %v387 = vpop.f32.mrb[0].mxu0
  %v388 = vadd.f32 %v87, %v387
  %v389 = vpop.f32.mrb[0].mxu0
  %v390 = vadd.f32 %v91, %v389
  %v391 = vpop.f32.mrb[0].mxu0
  %v392 = vadd.f32 %v87, %v391
  %v393 = vpop.f32.mrb[0].mxu0
  %v394 = vadd.f32 %v91, %v393
  %395 = vmatprep.mubr.bf16.mxu0 0
  %396 = vmatmul.mubr.bf16.gmra.mrb[0].mxu0 %v113
  %v397 = vpop.f32.mrb[0].mxu0
  %v398 = vadd.f32 %v87, %v397
  %v399 = vpop.f32.mrb[0].mxu0
  %v400 = vadd.f32 %v91, %v399
  %v401 = vpop.f32.mrb[0].mxu0
  %v402 = vadd.f32 %v87, %v401
  %v403 = vpop.f32.mrb[0].mxu0
  %v404 = vadd.f32 %v91, %v403
  %405 = vmatprep.mubr.bf16.mxu0 0
  %406 = vmatmul.mubr.bf16.gmra.mrb[0].mxu0 %v114
  %v407 = vpop.f32.mrb[0].mxu0
  %v408 = vadd.f32 %v87, %v407
  %v409 = vpop.f32.mrb[0].mxu0
  %v410 = vadd.f32 %v91, %v409
  %v411 = vpop.f32.mrb[0].mxu0
  %v412 = vadd.f32 %v87, %v411
  %v413 = vpop.f32.mrb[0].mxu0
  %v414 = vadd.f32 %v91, %v413
  %415 = vmatprep.mubr.bf16.mxu0 0
  %416 = vmatmul.mubr.bf16.gmra.mrb[0].mxu0 %v115
  %v417 = vpop.f32.mrb[0].mxu0
  %v418 = vadd.f32 %v87, %v417
  %v419 = vpop.f32.mrb[0].mxu0
  %v420 = vadd.f32 %v91, %v419
  %v421 = vpop.f32.mrb[0].mxu0
  %v422 = vadd.f32 %v87, %v421
  %v423 = vpop.f32.mrb[0].mxu0
  %v424 = vadd.f32 %v91, %v423
  %425 = vdwg.mxu0
  %426 = vst [vmem:[#allocation4] sm:$0xff] %v315
  %427 = vst [vmem:[#allocation4 + $0x8] sm:$0xff] %v317
  %428 = vst [vmem:[#allocation4 + $0x10] sm:$0xff] %v388
  %429 = vst [vmem:[#allocation4 + $0x18] sm:$0xff] %v390
  %430 = vst [vmem:[#allocation4 + $0x20] sm:$0xff] %v319
  %431 = vst [vmem:[#allocation4 + $0x28] sm:$0xff] %v321
  %432 = vst [vmem:[#allocation4 + $0x30] sm:$0xff] %v392
  %433 = vst [vmem:[#allocation4 + $0x38] sm:$0xff] %v394
  %434 = vst [vmem:[#allocation4 + $0x40] sm:$0xff] %v325
  %435 = vst [vmem:[#allocation4 + $0x48] sm:$0xff] %v327
  %436 = vst [vmem:[#allocation4 + $0x50] sm:$0xff] %v398
  %437 = vst [vmem:[#allocation4 + $0x58] sm:$0xff] %v400
  %438 = vst [vmem:[#allocation4 + $0x60] sm:$0xff] %v329
  %439 = vst [vmem:[#allocation4 + $0x68] sm:$0xff] %v331
  %440 = vst [vmem:[#allocation4 + $0x70] sm:$0xff] %v402
  %441 = vst [vmem:[#allocation4 + $0x78] sm:$0xff] %v404
  %442 = vst [vmem:[#allocation4 + $0x80] sm:$0xff] %v335
  %443 = vst [vmem:[#allocation4 + $0x88] sm:$0xff] %v337
  %444 = vst [vmem:[#allocation4 + $0x90] sm:$0xff] %v408
  %445 = vst [vmem:[#allocation4 + $0x98] sm:$0xff] %v410
  %446 = vst [vmem:[#allocation4 + $0xa0] sm:$0xff] %v339
  %447 = vst [vmem:[#allocation4 + $0xa8] sm:$0xff] %v341
  %448 = vst [vmem:[#allocation4 + $0xb0] sm:$0xff] %v412
  %449 = vst [vmem:[#allocation4 + $0xb8] sm:$0xff] %v414
  %450 = vst [vmem:[#allocation4 + $0xc0] sm:$0xff] %v345
  %451 = vst [vmem:[#allocation4 + $0xc8] sm:$0xff] %v347
  %452 = vst [vmem:[#allocation4 + $0xd0] sm:$0xff] %v418
  %453 = vst [vmem:[#allocation4 + $0xd8] sm:$0xff] %v420
  %454 = vst [vmem:[#allocation4 + $0xe0] sm:$0xff] %v349
  %455 = vst [vmem:[#allocation4 + $0xe8] sm:$0xff] %v351
  %456 = vst [vmem:[#allocation4 + $0xf0] sm:$0xff] %v422
  %457 = vst [vmem:[#allocation4 + $0xf8] sm:$0xff] %v424
  %v458 = vld [vmem:[%s5] sm:$0xff]
  %v459 = vld [vmem:[%s3] sm:$0xff]
  %v460 = vld [vmem:[%s3 + $0x8] sm:$0xff]
  %v461 = vld [vmem:[%s3 + $0x10] sm:$0xff]
  %v462 = vld [vmem:[%s3 + $0x18] sm:$0xff]
  %v463 = vld [vmem:[%s3 + $0x20] sm:$0xff]
  %v464 = vld [vmem:[%s3 + $0x28] sm:$0xff]
  %v465 = vld [vmem:[%s3 + $0x30] sm:$0xff]
  %v466 = vld [vmem:[%s3 + $0x38] sm:$0xff]
  %v467 = vld [vmem:[%s3 + $0x40] sm:$0xff]
  %v468 = vld [vmem:[%s3 + $0x48] sm:$0xff]
  %v469 = vld [vmem:[%s3 + $0x50] sm:$0xff]
  %v470 = vld [vmem:[%s3 + $0x58] sm:$0xff]
  %v471 = vld [vmem:[%s3 + $0x60] sm:$0xff]
  %v472 = vld [vmem:[%s3 + $0x68] sm:$0xff]
  %v473 = vld [vmem:[%s3 + $0x70] sm:$0xff]
  %v474 = vld [vmem:[%s3 + $0x78] sm:$0xff]
  %v475 = vld [vmem:[%s3 + $0x80] sm:$0xff]
  %v476 = vld [vmem:[%s3 + $0x88] sm:$0xff]
  %v477 = vld [vmem:[%s3 + $0x90] sm:$0xff]
  %v478 = vld [vmem:[%s3 + $0x98] sm:$0xff]
  %v479 = vld [vmem:[%s3 + $0xa0] sm:$0xff]
  %v480 = vld [vmem:[%s3 + $0xa8] sm:$0xff]
  %v481 = vld [vmem:[%s3 + $0xb0] sm:$0xff]
  %v482 = vld [vmem:[%s3 + $0xb8] sm:$0xff]
  %v483 = vld [vmem:[%s3 + $0xc0] sm:$0xff]
  %v484 = vld [vmem:[%s3 + $0xc8] sm:$0xff]
  %v485 = vld [vmem:[%s3 + $0xd0] sm:$0xff]
  %v486 = vld [vmem:[%s3 + $0xd8] sm:$0xff]
  %v487 = vld [vmem:[%s3 + $0xe0] sm:$0xff]
  %v488 = vld [vmem:[%s3 + $0xe8] sm:$0xff]
  %v489 = vld [vmem:[%s3 + $0xf0] sm:$0xff]
  %v490 = vld [vmem:[%s3 + $0xf8] sm:$0xff]
  %s491 = smul.u32 0, 8
  %v492 = vld [vmem:[#allocation2] sm:$0xff]
  %v493 = vld [vmem:[#allocation3] sm:$0xff]
  %s494 = smul.u32 0, 4
  %s495 = smul.addr %s494, 8
  %s496 = scalar_lea.vmem [#allocation4], %s495
  %v497 = vld [vmem:[%s496] sm:$0xff]
  %v498 = vld [vmem:[%s496 + $0x8] sm:$0xff]
  %v499 = vld [vmem:[%s496 + $0x10] sm:$0xff]
  %v500 = vld [vmem:[%s496 + $0x18] sm:$0xff]
  %v501 = vpack.c.bf16 %v492, %v492
  %v534 = vunpack.c.l.b16 %v459
  %v535 = vunpack.c.h.b16 %v459
  %v536 = vunpack.c.l.b16 %v460
  %v537 = vunpack.c.h.b16 %v460
  %v538 = vunpack.c.l.b16 %v461
  %v539 = vunpack.c.h.b16 %v461
  %v540 = vunpack.c.l.b16 %v462
  %v541 = vunpack.c.h.b16 %v462
  %v542 = vunpack.c.l.b16 %v463
  %v543 = vunpack.c.h.b16 %v463
  %v544 = vunpack.c.l.b16 %v464
  %v545 = vunpack.c.h.b16 %v464
  %v546 = vunpack.c.l.b16 %v465
  %v547 = vunpack.c.h.b16 %v465
  %v548 = vunpack.c.l.b16 %v466
  %v549 = vunpack.c.h.b16 %v466
  %v550 = vunpack.c.l.b16 %v467
  %v551 = vunpack.c.h.b16 %v467
  %v552 = vunpack.c.l.b16 %v468
  %v553 = vunpack.c.h.b16 %v468
  %v554 = vunpack.c.l.b16 %v469
  %v555 = vunpack.c.h.b16 %v469
  %v556 = vunpack.c.l.b16 %v470
  %v557 = vunpack.c.h.b16 %v470
  %v558 = vunpack.c.l.b16 %v471
  %v559 = vunpack.c.h.b16 %v471
  %v560 = vunpack.c.l.b16 %v472
  %v561 = vunpack.c.h.b16 %v472
  %v562 = vunpack.c.l.b16 %v473
  %v563 = vunpack.c.h.b16 %v473
  %v564 = vunpack.c.l.b16 %v474
  %v565 = vunpack.c.h.b16 %v474
  %v566 = vunpack.c.l.b16 %v475
  %v567 = vunpack.c.h.b16 %v475
  %v568 = vunpack.c.l.b16 %v476
  %v569 = vunpack.c.h.b16 %v476
  %v570 = vunpack.c.l.b16 %v477
  %v571 = vunpack.c.h.b16 %v477
  %v572 = vunpack.c.l.b16 %v478
  %v573 = vunpack.c.h.b16 %v478
  %v574 = vunpack.c.l.b16 %v479
  %v575 = vunpack.c.h.b16 %v479
  %v576 = vunpack.c.l.b16 %v480
  %v577 = vunpack.c.h.b16 %v480
  %v578 = vunpack.c.l.b16 %v481
  %v579 = vunpack.c.h.b16 %v481
  %v580 = vunpack.c.l.b16 %v482
  %v581 = vunpack.c.h.b16 %v482
  %v582 = vunpack.c.l.b16 %v483
  %v583 = vunpack.c.h.b16 %v483
  %v584 = vunpack.c.l.b16 %v484
  %v585 = vunpack.c.h.b16 %v484
  %v586 = vunpack.c.l.b16 %v485
  %v587 = vunpack.c.h.b16 %v485
  %v588 = vunpack.c.l.b16 %v486
  %v589 = vunpack.c.h.b16 %v486
  %v590 = vunpack.c.l.b16 %v487
  %v591 = vunpack.c.h.b16 %v487
  %v592 = vunpack.c.l.b16 %v488
  %v593 = vunpack.c.h.b16 %v488
  %v594 = vunpack.c.l.b16 %v489
  %v595 = vunpack.c.h.b16 %v489
  %v596 = vunpack.c.l.b16 %v490
  %v597 = vunpack.c.h.b16 %v490
  %v598 = vpack.c.b16 %v538, %v534
  %v599 = vpack.c.b16 %v539, %v535
  %v600 = vpack.c.b16 %v540, %v536
  %v601 = vpack.c.b16 %v541, %v537
  %v602 = vpack.c.b16 %v546, %v542
  %v603 = vpack.c.b16 %v547, %v543
  %v604 = vpack.c.b16 %v548, %v544
  %v605 = vpack.c.b16 %v549, %v545
  %v606 = vpack.c.b16 %v554, %v550
  %v607 = vpack.c.b16 %v555, %v551
  %v608 = vpack.c.b16 %v556, %v552
  %v609 = vpack.c.b16 %v557, %v553
  %v610 = vpack.c.b16 %v562, %v558
  %v611 = vpack.c.b16 %v563, %v559
  %v612 = vpack.c.b16 %v564, %v560
  %v613 = vpack.c.b16 %v565, %v561
  %v614 = vpack.c.b16 %v570, %v566
  %v615 = vpack.c.b16 %v571, %v567
  %v616 = vpack.c.b16 %v572, %v568
  %v617 = vpack.c.b16 %v573, %v569
  %v618 = vpack.c.b16 %v578, %v574
  %v619 = vpack.c.b16 %v579, %v575
  %v620 = vpack.c.b16 %v580, %v576
  %v621 = vpack.c.b16 %v581, %v577
  %v622 = vpack.c.b16 %v586, %v582
  %v623 = vpack.c.b16 %v587, %v583
  %v624 = vpack.c.b16 %v588, %v584
  %v625 = vpack.c.b16 %v589, %v585
  %v626 = vpack.c.b16 %v594, %v590
  %v627 = vpack.c.b16 %v595, %v591
  %v628 = vpack.c.b16 %v596, %v592
  %v629 = vpack.c.b16 %v597, %v593
  %662 = vmatprep.subr.bf16.mxu0 %v599
  %663 = vmatpush1.bf16.msra.mxu0 %v598
  %664 = vmatprep.subr.bf16.mxu0 %v603
  %665 = vmatpush1.bf16.msra.mxu0 %v602
  %666 = vmatprep.subr.bf16.mxu0 %v607
  %667 = vmatpush1.bf16.msra.mxu0 %v606
  %668 = vmatprep.subr.bf16.mxu0 %v611
  %669 = vmatpush1.bf16.msra.mxu0 %v610
  %670 = vmatprep.subr.bf16.mxu0 %v615
  %671 = vmatpush1.bf16.msra.mxu0 %v614
  %672 = vmatprep.subr.bf16.mxu0 %v619
  %673 = vmatpush1.bf16.msra.mxu0 %v618
  %674 = vmatprep.subr.bf16.mxu0 %v623
  %675 = vmatpush1.bf16.msra.mxu0 %v622
  %676 = vmatprep.subr.bf16.mxu0 %v627
  %677 = vmatpush1.bf16.msra.mxu0 %v626
  %678 = vmatprep.subr.bf16.mxu0 0
  %679 = vmatpush1.bf16.msra.mxu0 0
  %680 = vmatprep.subr.bf16.mxu0 0
  %681 = vmatpush1.bf16.msra.mxu0 0
  %682 = vmatprep.subr.bf16.mxu0 0
  %683 = vmatpush1.bf16.msra.mxu0 0
  %684 = vmatprep.subr.bf16.mxu0 0
  %685 = vmatpush1.bf16.msra.mxu0 0
  %686 = vmatprep.subr.bf16.mxu0 0
  %687 = vmatpush1.bf16.msra.mxu0 0
  %688 = vmatprep.subr.bf16.mxu0 0
  %689 = vmatpush1.bf16.msra.mxu0 0
  %690 = vmatprep.subr.bf16.mxu0 0
  %691 = vmatpush1.bf16.msra.mxu0 0
  %692 = vmatprep.subr.bf16.mxu0 0
  %693 = vmatpush1.bf16.msra.mxu0 0
  %694 = vmatprep.mubr.bf16.mxu0 0
  %695 = vmatmul.mubr.bf16.gmra.mrb[0].mxu0 %v501
  %v696 = vpop.f32.mrb[0].mxu0
  %v697 = vadd.f32 0.0, %v696
  %v698 = vpop.f32.mrb[0].mxu0
  %v699 = vadd.f32 0.0, %v698
  %v700 = vpop.f32.mrb[0].mxu0
  %v701 = vpop.f32.mrb[0].mxu0
  %702 = vdwg.mxu0
  %703 = vmatprep.subr.bf16.mxu0 %v601
  %704 = vmatpush1.bf16.msra.mxu0 %v600
  %705 = vmatprep.subr.bf16.mxu0 %v605
  %706 = vmatpush1.bf16.msra.mxu0 %v604
  %707 = vmatprep.subr.bf16.mxu0 %v609
  %708 = vmatpush1.bf16.msra.mxu0 %v608
  %709 = vmatprep.subr.bf16.mxu0 %v613
  %710 = vmatpush1.bf16.msra.mxu0 %v612
  %711 = vmatprep.subr.bf16.mxu0 %v617
  %712 = vmatpush1.bf16.msra.mxu0 %v616
  %713 = vmatprep.subr.bf16.mxu0 %v621
  %714 = vmatpush1.bf16.msra.mxu0 %v620
  %715 = vmatprep.subr.bf16.mxu0 %v625
  %716 = vmatpush1.bf16.msra.mxu0 %v624
  %717 = vmatprep.subr.bf16.mxu0 %v629
  %718 = vmatpush1.bf16.msra.mxu0 %v628
  %719 = vmatprep.subr.bf16.mxu0 0
  %720 = vmatpush1.bf16.msra.mxu0 0
  %721 = vmatprep.subr.bf16.mxu0 0
  %722 = vmatpush1.bf16.msra.mxu0 0
  %723 = vmatprep.subr.bf16.mxu0 0
  %724 = vmatpush1.bf16.msra.mxu0 0
  %725 = vmatprep.subr.bf16.mxu0 0
  %726 = vmatpush1.bf16.msra.mxu0 0
  %727 = vmatprep.subr.bf16.mxu0 0
  %728 = vmatpush1.bf16.msra.mxu0 0
  %729 = vmatprep.subr.bf16.mxu0 0
  %730 = vmatpush1.bf16.msra.mxu0 0
  %731 = vmatprep.subr.bf16.mxu0 0
  %732 = vmatpush1.bf16.msra.mxu0 0
  %733 = vmatprep.subr.bf16.mxu0 0
  %734 = vmatpush1.bf16.msra.mxu0 0
  %735 = vmatprep.mubr.bf16.mxu0 0
  %736 = vmatmul.mubr.bf16.gmra.mrb[0].mxu0 %v501
  %v737 = vpop.f32.mrb[0].mxu0
  %v738 = vadd.f32 0.0, %v737
  %v739 = vpop.f32.mrb[0].mxu0
  %v740 = vadd.f32 0.0, %v739
  %v741 = vpop.f32.mrb[0].mxu0
  %v742 = vpop.f32.mrb[0].mxu0
  %743 = vdwg.mxu0
  %v744 = vadd.f32 %v497, %v697
  %v745 = vadd.f32 %v498, %v699
  %v746 = vadd.f32 %v499, %v738
  %v747 = vadd.f32 %v500, %v740
  %v748 = vxor.u32 %v744, 2147483648
  %v749 = vxor.u32 %v745, 2147483648
  %v750 = vxor.u32 %v746, 2147483648
  %v751 = vmul.f32 %v748, 1.442695
  %v752 = vpow.pop %v751
  %v753 = vmul.f32 %v749, 1.442695
  %v754 = vpow.pop %v753
  %v755 = vmul.f32 %v750, 1.442695
  %v756 = vpow.pop %v755
  %v757 = vadd.f32 %v752, 1.0
  %v758 = vadd.f32 %v754, 1.0
  %v759 = vadd.f32 %v756, 1.0
  %v760 = vrcp.pop %v757
  %v761 = vmul.f32 1.0, %v760
  %v762 = vrcp.pop %v758
  %v763 = vmul.f32 1.0, %v762
  %v764 = vrcp.pop %v759
  %v765 = vmul.f32 1.0, %v764
  %v766 = vtanh.pop %v747
  %v767 = vmul.f32 %v763, %v493
  %v768 = vmul.f32 %v761, %v766
  %v769 = vadd.f32 %v767, %v768
  %v770 = vtanh.pop %v769
  %v771 = vmul.f32 %v765, %v770
  %v772 = vstv %s491
  %vm773 = vcmp.lt.s32.totalorder %v772, %v458
  %v774 = vsel %vm773, 1, 0
  %775 = vset.pattern.permute.xlu0 0
  %776 = vperm.xlu0 %775, %v774
  %v777 = vpop.permute.xlu0 %776
  %vm778 = vcmp.eq.s32.totalorder %v777, 1
  %v779 = vsel %vm778, %v771, %v492
  %780 = vst [vmem:[#allocation2] sm:$0xff] %v779
  %v781 = vsel %vm778, %v769, %v493
  %782 = vst [vmem:[#allocation3] sm:$0xff] %v781
  %v783 = vsel %vm778, %v771, 0.0
  %v784 = vpack.c.bf16 %v783, %v783
  %785 = vst [vmem:[%s6] sm:$0xf] %v784
  %s786 = sadd.s32 %s491, 1
  %v787 = vld [vmem:[#allocation2] sm:$0xff]
  %v788 = vld [vmem:[#allocation3] sm:$0xff]
  %s789 = smul.u32 1, 4
  %s790 = smul.addr %s789, 8
  %s791 = scalar_lea.vmem [#allocation4], %s790
  %v792 = vld [vmem:[%s791] sm:$0xff]
  %v793 = vld [vmem:[%s791 + $0x8] sm:$0xff]
  %v794 = vld [vmem:[%s791 + $0x10] sm:$0xff]
  %v795 = vld [vmem:[%s791 + $0x18] sm:$0xff]
  %v796 = vpack.c.bf16 %v787, %v787
  %797 = vmatprep.subr.bf16.mxu0 %v599
  %798 = vmatpush1.bf16.msra.mxu0 %v598
  %799 = vmatprep.subr.bf16.mxu0 %v603
  %800 = vmatpush1.bf16.msra.mxu0 %v602
  %801 = vmatprep.subr.bf16.mxu0 %v607
  %802 = vmatpush1.bf16.msra.mxu0 %v606
  %803 = vmatprep.subr.bf16.mxu0 %v611
  %804 = vmatpush1.bf16.msra.mxu0 %v610
  %805 = vmatprep.subr.bf16.mxu0 %v615
  %806 = vmatpush1.bf16.msra.mxu0 %v614
  %807 = vmatprep.subr.bf16.mxu0 %v619
  %808 = vmatpush1.bf16.msra.mxu0 %v618
  %809 = vmatprep.subr.bf16.mxu0 %v623
  %810 = vmatpush1.bf16.msra.mxu0 %v622
  %811 = vmatprep.subr.bf16.mxu0 %v627
  %812 = vmatpush1.bf16.msra.mxu0 %v626
  %813 = vmatprep.subr.bf16.mxu0 0
  %814 = vmatpush1.bf16.msra.mxu0 0
  %815 = vmatprep.subr.bf16.mxu0 0
  %816 = vmatpush1.bf16.msra.mxu0 0
  %817 = vmatprep.subr.bf16.mxu0 0
  %818 = vmatpush1.bf16.msra.mxu0 0
  %819 = vmatprep.subr.bf16.mxu0 0
  %820 = vmatpush1.bf16.msra.mxu0 0
  %821 = vmatprep.subr.bf16.mxu0 0
  %822 = vmatpush1.bf16.msra.mxu0 0
  %823 = vmatprep.subr.bf16.mxu0 0
  %824 = vmatpush1.bf16.msra.mxu0 0
  %825 = vmatprep.subr.bf16.mxu0 0
  %826 = vmatpush1.bf16.msra.mxu0 0
  %827 = vmatprep.subr.bf16.mxu0 0
  %828 = vmatpush1.bf16.msra.mxu0 0
  %829 = vmatprep.mubr.bf16.mxu0 0
  %830 = vmatmul.mubr.bf16.gmra.mrb[0].mxu0 %v796
  %v831 = vpop.f32.mrb[0].mxu0
  %v832 = vadd.f32 0.0, %v831
  %v833 = vpop.f32.mrb[0].mxu0
  %v834 = vadd.f32 0.0, %v833
  %v835 = vpop.f32.mrb[0].mxu0
  %v836 = vpop.f32.mrb[0].mxu0
  %837 = vdwg.mxu0
  %838 = vmatprep.subr.bf16.mxu0 %v601
  %839 = vmatpush1.bf16.msra.mxu0 %v600
  %840 = vmatprep.subr.bf16.mxu0 %v605
  %841 = vmatpush1.bf16.msra.mxu0 %v604
  %842 = vmatprep.subr.bf16.mxu0 %v609
  %843 = vmatpush1.bf16.msra.mxu0 %v608
  %844 = vmatprep.subr.bf16.mxu0 %v613
  %845 = vmatpush1.bf16.msra.mxu0 %v612
  %846 = vmatprep.subr.bf16.mxu0 %v617
  %847 = vmatpush1.bf16.msra.mxu0 %v616
  %848 = vmatprep.subr.bf16.mxu0 %v621
  %849 = vmatpush1.bf16.msra.mxu0 %v620
  %850 = vmatprep.subr.bf16.mxu0 %v625
  %851 = vmatpush1.bf16.msra.mxu0 %v624
  %852 = vmatprep.subr.bf16.mxu0 %v629
  %853 = vmatpush1.bf16.msra.mxu0 %v628
  %854 = vmatprep.subr.bf16.mxu0 0
  %855 = vmatpush1.bf16.msra.mxu0 0
  %856 = vmatprep.subr.bf16.mxu0 0
  %857 = vmatpush1.bf16.msra.mxu0 0
  %858 = vmatprep.subr.bf16.mxu0 0
  %859 = vmatpush1.bf16.msra.mxu0 0
  %860 = vmatprep.subr.bf16.mxu0 0
  %861 = vmatpush1.bf16.msra.mxu0 0
  %862 = vmatprep.subr.bf16.mxu0 0
  %863 = vmatpush1.bf16.msra.mxu0 0
  %864 = vmatprep.subr.bf16.mxu0 0
  %865 = vmatpush1.bf16.msra.mxu0 0
  %866 = vmatprep.subr.bf16.mxu0 0
  %867 = vmatpush1.bf16.msra.mxu0 0
  %868 = vmatprep.subr.bf16.mxu0 0
  %869 = vmatpush1.bf16.msra.mxu0 0
  %870 = vmatprep.mubr.bf16.mxu0 0
  %871 = vmatmul.mubr.bf16.gmra.mrb[0].mxu0 %v796
  %v872 = vpop.f32.mrb[0].mxu0
  %v873 = vadd.f32 0.0, %v872
  %v874 = vpop.f32.mrb[0].mxu0
  %v875 = vadd.f32 0.0, %v874
  %v876 = vpop.f32.mrb[0].mxu0
  %v877 = vpop.f32.mrb[0].mxu0
  %878 = vdwg.mxu0
  %v879 = vadd.f32 %v792, %v832
  %v880 = vadd.f32 %v793, %v834
  %v881 = vadd.f32 %v794, %v873
  %v882 = vadd.f32 %v795, %v875
  %v883 = vxor.u32 %v879, 2147483648
  %v884 = vxor.u32 %v880, 2147483648
  %v885 = vxor.u32 %v881, 2147483648
  %v886 = vmul.f32 %v883, 1.442695
  %v887 = vpow.pop %v886
  %v888 = vmul.f32 %v884, 1.442695
  %v889 = vpow.pop %v888
  %v890 = vmul.f32 %v885, 1.442695
  %v891 = vpow.pop %v890
  %v892 = vadd.f32 %v887, 1.0
  %v893 = vadd.f32 %v889, 1.0
  %v894 = vadd.f32 %v891, 1.0
  %v895 = vrcp.pop %v892
  %v896 = vmul.f32 1.0, %v895
  %v897 = vrcp.pop %v893
  %v898 = vmul.f32 1.0, %v897
  %v899 = vrcp.pop %v894
  %v900 = vmul.f32 1.0, %v899
  %v901 = vtanh.pop %v882
  %v902 = vmul.f32 %v898, %v788
  %v903 = vmul.f32 %v896, %v901
  %v904 = vadd.f32 %v902, %v903
  %v905 = vtanh.pop %v904
  %v906 = vmul.f32 %v900, %v905
  %v907 = vstv %s786
  %vm908 = vcmp.lt.s32.totalorder %v907, %v458
  %v909 = vsel %vm908, 1, 0
  %910 = vset.pattern.permute.xlu0 0
  %911 = vperm.xlu0 %910, %v909
  %v912 = vpop.permute.xlu0 %911
  %vm913 = vcmp.eq.s32.totalorder %v912, 1
  %v914 = vsel %vm913, %v906, %v787
  %915 = vst [vmem:[#allocation2] sm:$0xff] %v914
  %v916 = vsel %vm913, %v904, %v788
  %917 = vst [vmem:[#allocation3] sm:$0xff] %v916
  %v918 = vsel %vm913, %v906, 0.0
  %v919 = vpack.c.bf16 %v918, %v918
  %s920 = scalar_lea.vmem %s6, 4
  %921 = vst [vmem:[%s920] sm:$0xf] %v919
  %s922 = sadd.s32 %s491, 2
  %v923 = vld [vmem:[#allocation2] sm:$0xff]
  %v924 = vld [vmem:[#allocation3] sm:$0xff]
  %s925 = smul.u32 2, 4
  %s926 = smul.addr %s925, 8
  %s927 = scalar_lea.vmem [#allocation4], %s926
  %v928 = vld [vmem:[%s927] sm:$0xff]
  %v929 = vld [vmem:[%s927 + $0x8] sm:$0xff]
  %v930 = vld [vmem:[%s927 + $0x10] sm:$0xff]
  %v931 = vld [vmem:[%s927 + $0x18] sm:$0xff]
  %v932 = vpack.c.bf16 %v923, %v923
  %933 = vmatprep.subr.bf16.mxu0 %v599
  %934 = vmatpush1.bf16.msra.mxu0 %v598
  %935 = vmatprep.subr.bf16.mxu0 %v603
  %936 = vmatpush1.bf16.msra.mxu0 %v602
  %937 = vmatprep.subr.bf16.mxu0 %v607
  %938 = vmatpush1.bf16.msra.mxu0 %v606
  %939 = vmatprep.subr.bf16.mxu0 %v611
  %940 = vmatpush1.bf16.msra.mxu0 %v610
  %941 = vmatprep.subr.bf16.mxu0 %v615
  %942 = vmatpush1.bf16.msra.mxu0 %v614
  %943 = vmatprep.subr.bf16.mxu0 %v619
  %944 = vmatpush1.bf16.msra.mxu0 %v618
  %945 = vmatprep.subr.bf16.mxu0 %v623
  %946 = vmatpush1.bf16.msra.mxu0 %v622
  %947 = vmatprep.subr.bf16.mxu0 %v627
  %948 = vmatpush1.bf16.msra.mxu0 %v626
  %949 = vmatprep.subr.bf16.mxu0 0
  %950 = vmatpush1.bf16.msra.mxu0 0
  %951 = vmatprep.subr.bf16.mxu0 0
  %952 = vmatpush1.bf16.msra.mxu0 0
  %953 = vmatprep.subr.bf16.mxu0 0
  %954 = vmatpush1.bf16.msra.mxu0 0
  %955 = vmatprep.subr.bf16.mxu0 0
  %956 = vmatpush1.bf16.msra.mxu0 0
  %957 = vmatprep.subr.bf16.mxu0 0
  %958 = vmatpush1.bf16.msra.mxu0 0
  %959 = vmatprep.subr.bf16.mxu0 0
  %960 = vmatpush1.bf16.msra.mxu0 0
  %961 = vmatprep.subr.bf16.mxu0 0
  %962 = vmatpush1.bf16.msra.mxu0 0
  %963 = vmatprep.subr.bf16.mxu0 0
  %964 = vmatpush1.bf16.msra.mxu0 0
  %965 = vmatprep.mubr.bf16.mxu0 0
  %966 = vmatmul.mubr.bf16.gmra.mrb[0].mxu0 %v932
  %v967 = vpop.f32.mrb[0].mxu0
  %v968 = vadd.f32 0.0, %v967
  %v969 = vpop.f32.mrb[0].mxu0
  %v970 = vadd.f32 0.0, %v969
  %v971 = vpop.f32.mrb[0].mxu0
  %v972 = vpop.f32.mrb[0].mxu0
  %973 = vdwg.mxu0
  %974 = vmatprep.subr.bf16.mxu0 %v601
  %975 = vmatpush1.bf16.msra.mxu0 %v600
  %976 = vmatprep.subr.bf16.mxu0 %v605
  %977 = vmatpush1.bf16.msra.mxu0 %v604
  %978 = vmatprep.subr.bf16.mxu0 %v609
  %979 = vmatpush1.bf16.msra.mxu0 %v608
  %980 = vmatprep.subr.bf16.mxu0 %v613
  %981 = vmatpush1.bf16.msra.mxu0 %v612
  %982 = vmatprep.subr.bf16.mxu0 %v617
  %983 = vmatpush1.bf16.msra.mxu0 %v616
  %984 = vmatprep.subr.bf16.mxu0 %v621
  %985 = vmatpush1.bf16.msra.mxu0 %v620
  %986 = vmatprep.subr.bf16.mxu0 %v625
  %987 = vmatpush1.bf16.msra.mxu0 %v624
  %988 = vmatprep.subr.bf16.mxu0 %v629
  %989 = vmatpush1.bf16.msra.mxu0 %v628
  %990 = vmatprep.subr.bf16.mxu0 0
  %991 = vmatpush1.bf16.msra.mxu0 0
  %992 = vmatprep.subr.bf16.mxu0 0
  %993 = vmatpush1.bf16.msra.mxu0 0
  %994 = vmatprep.subr.bf16.mxu0 0
  %995 = vmatpush1.bf16.msra.mxu0 0
  %996 = vmatprep.subr.bf16.mxu0 0
  %997 = vmatpush1.bf16.msra.mxu0 0
  %998 = vmatprep.subr.bf16.mxu0 0
  %999 = vmatpush1.bf16.msra.mxu0 0
  %1000 = vmatprep.subr.bf16.mxu0 0
  %1001 = vmatpush1.bf16.msra.mxu0 0
  %1002 = vmatprep.subr.bf16.mxu0 0
  %1003 = vmatpush1.bf16.msra.mxu0 0
  %1004 = vmatprep.subr.bf16.mxu0 0
  %1005 = vmatpush1.bf16.msra.mxu0 0
  %1006 = vmatprep.mubr.bf16.mxu0 0
  %1007 = vmatmul.mubr.bf16.gmra.mrb[0].mxu0 %v932
  %v1008 = vpop.f32.mrb[0].mxu0
  %v1009 = vadd.f32 0.0, %v1008
  %v1010 = vpop.f32.mrb[0].mxu0
  %v1011 = vadd.f32 0.0, %v1010
  %v1012 = vpop.f32.mrb[0].mxu0
  %v1013 = vpop.f32.mrb[0].mxu0
  %1014 = vdwg.mxu0
  %v1015 = vadd.f32 %v928, %v968
  %v1016 = vadd.f32 %v929, %v970
  %v1017 = vadd.f32 %v930, %v1009
  %v1018 = vadd.f32 %v931, %v1011
  %v1019 = vxor.u32 %v1015, 2147483648
  %v1020 = vxor.u32 %v1016, 2147483648
  %v1021 = vxor.u32 %v1017, 2147483648
  %v1022 = vmul.f32 %v1019, 1.442695
  %v1023 = vpow.pop %v1022
  %v1024 = vmul.f32 %v1020, 1.442695
  %v1025 = vpow.pop %v1024
  %v1026 = vmul.f32 %v1021, 1.442695
  %v1027 = vpow.pop %v1026
  %v1028 = vadd.f32 %v1023, 1.0
  %v1029 = vadd.f32 %v1025, 1.0
  %v1030 = vadd.f32 %v1027, 1.0
  %v1031 = vrcp.pop %v1028
  %v1032 = vmul.f32 1.0, %v1031
  %v1033 = vrcp.pop %v1029
  %v1034 = vmul.f32 1.0, %v1033
  %v1035 = vrcp.pop %v1030
  %v1036 = vmul.f32 1.0, %v1035
  %v1037 = vtanh.pop %v1018
  %v1038 = vmul.f32 %v1034, %v924
  %v1039 = vmul.f32 %v1032, %v1037
  %v1040 = vadd.f32 %v1038, %v1039
  %v1041 = vtanh.pop %v1040
  %v1042 = vmul.f32 %v1036, %v1041
  %v1043 = vstv %s922
  %vm1044 = vcmp.lt.s32.totalorder %v1043, %v458
  %v1045 = vsel %vm1044, 1, 0
  %1046 = vset.pattern.permute.xlu0 0
  %1047 = vperm.xlu0 %1046, %v1045
  %v1048 = vpop.permute.xlu0 %1047
  %vm1049 = vcmp.eq.s32.totalorder %v1048, 1
  %v1050 = vsel %vm1049, %v1042, %v923
  %1051 = vst [vmem:[#allocation2] sm:$0xff] %v1050
  %v1052 = vsel %vm1049, %v1040, %v924
  %1053 = vst [vmem:[#allocation3] sm:$0xff] %v1052
  %v1054 = vsel %vm1049, %v1042, 0.0
  %v1055 = vpack.c.bf16 %v1054, %v1054
  %s1056 = scalar_lea.vmem %s6, 8
  %1057 = vst [vmem:[%s1056] sm:$0xf] %v1055
  %s1058 = sadd.s32 %s491, 3
  %v1059 = vld [vmem:[#allocation2] sm:$0xff]
  %v1060 = vld [vmem:[#allocation3] sm:$0xff]
  %s1061 = smul.u32 3, 4
  %s1062 = smul.addr %s1061, 8
  %s1063 = scalar_lea.vmem [#allocation4], %s1062
  %v1064 = vld [vmem:[%s1063] sm:$0xff]
  %v1065 = vld [vmem:[%s1063 + $0x8] sm:$0xff]
  %v1066 = vld [vmem:[%s1063 + $0x10] sm:$0xff]
  %v1067 = vld [vmem:[%s1063 + $0x18] sm:$0xff]
  %v1068 = vpack.c.bf16 %v1059, %v1059
  %1069 = vmatprep.subr.bf16.mxu0 %v599
  %1070 = vmatpush1.bf16.msra.mxu0 %v598
  %1071 = vmatprep.subr.bf16.mxu0 %v603
  %1072 = vmatpush1.bf16.msra.mxu0 %v602
  %1073 = vmatprep.subr.bf16.mxu0 %v607
  %1074 = vmatpush1.bf16.msra.mxu0 %v606
  %1075 = vmatprep.subr.bf16.mxu0 %v611
  %1076 = vmatpush1.bf16.msra.mxu0 %v610
  %1077 = vmatprep.subr.bf16.mxu0 %v615
  %1078 = vmatpush1.bf16.msra.mxu0 %v614
  %1079 = vmatprep.subr.bf16.mxu0 %v619
  %1080 = vmatpush1.bf16.msra.mxu0 %v618
  %1081 = vmatprep.subr.bf16.mxu0 %v623
  %1082 = vmatpush1.bf16.msra.mxu0 %v622
  %1083 = vmatprep.subr.bf16.mxu0 %v627
  %1084 = vmatpush1.bf16.msra.mxu0 %v626
  %1085 = vmatprep.subr.bf16.mxu0 0
  %1086 = vmatpush1.bf16.msra.mxu0 0
  %1087 = vmatprep.subr.bf16.mxu0 0
  %1088 = vmatpush1.bf16.msra.mxu0 0
  %1089 = vmatprep.subr.bf16.mxu0 0
  %1090 = vmatpush1.bf16.msra.mxu0 0
  %1091 = vmatprep.subr.bf16.mxu0 0
  %1092 = vmatpush1.bf16.msra.mxu0 0
  %1093 = vmatprep.subr.bf16.mxu0 0
  %1094 = vmatpush1.bf16.msra.mxu0 0
  %1095 = vmatprep.subr.bf16.mxu0 0
  %1096 = vmatpush1.bf16.msra.mxu0 0
  %1097 = vmatprep.subr.bf16.mxu0 0
  %1098 = vmatpush1.bf16.msra.mxu0 0
  %1099 = vmatprep.subr.bf16.mxu0 0
  %1100 = vmatpush1.bf16.msra.mxu0 0
  %1101 = vmatprep.mubr.bf16.mxu0 0
  %1102 = vmatmul.mubr.bf16.gmra.mrb[0].mxu0 %v1068
  %v1103 = vpop.f32.mrb[0].mxu0
  %v1104 = vadd.f32 0.0, %v1103
  %v1105 = vpop.f32.mrb[0].mxu0
  %v1106 = vadd.f32 0.0, %v1105
  %v1107 = vpop.f32.mrb[0].mxu0
  %v1108 = vpop.f32.mrb[0].mxu0
  %1109 = vdwg.mxu0
  %1110 = vmatprep.subr.bf16.mxu0 %v601
  %1111 = vmatpush1.bf16.msra.mxu0 %v600
  %1112 = vmatprep.subr.bf16.mxu0 %v605
  %1113 = vmatpush1.bf16.msra.mxu0 %v604
  %1114 = vmatprep.subr.bf16.mxu0 %v609
  %1115 = vmatpush1.bf16.msra.mxu0 %v608
  %1116 = vmatprep.subr.bf16.mxu0 %v613
  %1117 = vmatpush1.bf16.msra.mxu0 %v612
  %1118 = vmatprep.subr.bf16.mxu0 %v617
  %1119 = vmatpush1.bf16.msra.mxu0 %v616
  %1120 = vmatprep.subr.bf16.mxu0 %v621
  %1121 = vmatpush1.bf16.msra.mxu0 %v620
  %1122 = vmatprep.subr.bf16.mxu0 %v625
  %1123 = vmatpush1.bf16.msra.mxu0 %v624
  %1124 = vmatprep.subr.bf16.mxu0 %v629
  %1125 = vmatpush1.bf16.msra.mxu0 %v628
  %1126 = vmatprep.subr.bf16.mxu0 0
  %1127 = vmatpush1.bf16.msra.mxu0 0
  %1128 = vmatprep.subr.bf16.mxu0 0
  %1129 = vmatpush1.bf16.msra.mxu0 0
  %1130 = vmatprep.subr.bf16.mxu0 0
  %1131 = vmatpush1.bf16.msra.mxu0 0
  %1132 = vmatprep.subr.bf16.mxu0 0
  %1133 = vmatpush1.bf16.msra.mxu0 0
  %1134 = vmatprep.subr.bf16.mxu0 0
  %1135 = vmatpush1.bf16.msra.mxu0 0
  %1136 = vmatprep.subr.bf16.mxu0 0
  %1137 = vmatpush1.bf16.msra.mxu0 0
  %1138 = vmatprep.subr.bf16.mxu0 0
  %1139 = vmatpush1.bf16.msra.mxu0 0
  %1140 = vmatprep.subr.bf16.mxu0 0
  %1141 = vmatpush1.bf16.msra.mxu0 0
  %1142 = vmatprep.mubr.bf16.mxu0 0
  %1143 = vmatmul.mubr.bf16.gmra.mrb[0].mxu0 %v1068
  %v1144 = vpop.f32.mrb[0].mxu0
  %v1145 = vadd.f32 0.0, %v1144
  %v1146 = vpop.f32.mrb[0].mxu0
  %v1147 = vadd.f32 0.0, %v1146
  %v1148 = vpop.f32.mrb[0].mxu0
  %v1149 = vpop.f32.mrb[0].mxu0
  %1150 = vdwg.mxu0
  %v1151 = vadd.f32 %v1064, %v1104
  %v1152 = vadd.f32 %v1065, %v1106
  %v1153 = vadd.f32 %v1066, %v1145
  %v1154 = vadd.f32 %v1067, %v1147
  %v1155 = vxor.u32 %v1151, 2147483648
  %v1156 = vxor.u32 %v1152, 2147483648
  %v1157 = vxor.u32 %v1153, 2147483648
  %v1158 = vmul.f32 %v1155, 1.442695
  %v1159 = vpow.pop %v1158
  %v1160 = vmul.f32 %v1156, 1.442695
  %v1161 = vpow.pop %v1160
  %v1162 = vmul.f32 %v1157, 1.442695
  %v1163 = vpow.pop %v1162
  %v1164 = vadd.f32 %v1159, 1.0
  %v1165 = vadd.f32 %v1161, 1.0
  %v1166 = vadd.f32 %v1163, 1.0
  %v1167 = vrcp.pop %v1164
  %v1168 = vmul.f32 1.0, %v1167
  %v1169 = vrcp.pop %v1165
  %v1170 = vmul.f32 1.0, %v1169
  %v1171 = vrcp.pop %v1166
  %v1172 = vmul.f32 1.0, %v1171
  %v1173 = vtanh.pop %v1154
  %v1174 = vmul.f32 %v1170, %v1060
  %v1175 = vmul.f32 %v1168, %v1173
  %v1176 = vadd.f32 %v1174, %v1175
  %v1177 = vtanh.pop %v1176
  %v1178 = vmul.f32 %v1172, %v1177
  %v1179 = vstv %s1058
  %vm1180 = vcmp.lt.s32.totalorder %v1179, %v458
  %v1181 = vsel %vm1180, 1, 0
  %1182 = vset.pattern.permute.xlu0 0
  %1183 = vperm.xlu0 %1182, %v1181
  %v1184 = vpop.permute.xlu0 %1183
  %vm1185 = vcmp.eq.s32.totalorder %v1184, 1
  %v1186 = vsel %vm1185, %v1178, %v1059
  %1187 = vst [vmem:[#allocation2] sm:$0xff] %v1186
  %v1188 = vsel %vm1185, %v1176, %v1060
  %1189 = vst [vmem:[#allocation3] sm:$0xff] %v1188
  %v1190 = vsel %vm1185, %v1178, 0.0
  %v1191 = vpack.c.bf16 %v1190, %v1190
  %s1192 = scalar_lea.vmem %s6, 12
  %1193 = vst [vmem:[%s1192] sm:$0xf] %v1191
  %s1194 = sadd.s32 %s491, 4
  %v1195 = vld [vmem:[#allocation2] sm:$0xff]
  %v1196 = vld [vmem:[#allocation3] sm:$0xff]
  %s1197 = smul.u32 4, 4
  %s1198 = smul.addr %s1197, 8
  %s1199 = scalar_lea.vmem [#allocation4], %s1198
  %v1200 = vld [vmem:[%s1199] sm:$0xff]
  %v1201 = vld [vmem:[%s1199 + $0x8] sm:$0xff]
  %v1202 = vld [vmem:[%s1199 + $0x10] sm:$0xff]
  %v1203 = vld [vmem:[%s1199 + $0x18] sm:$0xff]
  %v1204 = vpack.c.bf16 %v1195, %v1195
  %1205 = vmatprep.subr.bf16.mxu0 %v599
  %1206 = vmatpush1.bf16.msra.mxu0 %v598
  %1207 = vmatprep.subr.bf16.mxu0 %v603
  %1208 = vmatpush1.bf16.msra.mxu0 %v602
  %1209 = vmatprep.subr.bf16.mxu0 %v607
  %1210 = vmatpush1.bf16.msra.mxu0 %v606
  %1211 = vmatprep.subr.bf16.mxu0 %v611
  %1212 = vmatpush1.bf16.msra.mxu0 %v610
  %1213 = vmatprep.subr.bf16.mxu0 %v615
  %1214 = vmatpush1.bf16.msra.mxu0 %v614
  %1215 = vmatprep.subr.bf16.mxu0 %v619
  %1216 = vmatpush1.bf16.msra.mxu0 %v618
  %1217 = vmatprep.subr.bf16.mxu0 %v623
  %1218 = vmatpush1.bf16.msra.mxu0 %v622
  %1219 = vmatprep.subr.bf16.mxu0 %v627
  %1220 = vmatpush1.bf16.msra.mxu0 %v626
  %1221 = vmatprep.subr.bf16.mxu0 0
  %1222 = vmatpush1.bf16.msra.mxu0 0
  %1223 = vmatprep.subr.bf16.mxu0 0
  %1224 = vmatpush1.bf16.msra.mxu0 0
  %1225 = vmatprep.subr.bf16.mxu0 0
  %1226 = vmatpush1.bf16.msra.mxu0 0
  %1227 = vmatprep.subr.bf16.mxu0 0
  %1228 = vmatpush1.bf16.msra.mxu0 0
  %1229 = vmatprep.subr.bf16.mxu0 0
  %1230 = vmatpush1.bf16.msra.mxu0 0
  %1231 = vmatprep.subr.bf16.mxu0 0
  %1232 = vmatpush1.bf16.msra.mxu0 0
  %1233 = vmatprep.subr.bf16.mxu0 0
  %1234 = vmatpush1.bf16.msra.mxu0 0
  %1235 = vmatprep.subr.bf16.mxu0 0
  %1236 = vmatpush1.bf16.msra.mxu0 0
  %1237 = vmatprep.mubr.bf16.mxu0 0
  %1238 = vmatmul.mubr.bf16.gmra.mrb[0].mxu0 %v1204
  %v1239 = vpop.f32.mrb[0].mxu0
  %v1240 = vadd.f32 0.0, %v1239
  %v1241 = vpop.f32.mrb[0].mxu0
  %v1242 = vadd.f32 0.0, %v1241
  %v1243 = vpop.f32.mrb[0].mxu0
  %v1244 = vpop.f32.mrb[0].mxu0
  %1245 = vdwg.mxu0
  %1246 = vmatprep.subr.bf16.mxu0 %v601
  %1247 = vmatpush1.bf16.msra.mxu0 %v600
  %1248 = vmatprep.subr.bf16.mxu0 %v605
  %1249 = vmatpush1.bf16.msra.mxu0 %v604
  %1250 = vmatprep.subr.bf16.mxu0 %v609
  %1251 = vmatpush1.bf16.msra.mxu0 %v608
  %1252 = vmatprep.subr.bf16.mxu0 %v613
  %1253 = vmatpush1.bf16.msra.mxu0 %v612
  %1254 = vmatprep.subr.bf16.mxu0 %v617
  %1255 = vmatpush1.bf16.msra.mxu0 %v616
  %1256 = vmatprep.subr.bf16.mxu0 %v621
  %1257 = vmatpush1.bf16.msra.mxu0 %v620
  %1258 = vmatprep.subr.bf16.mxu0 %v625
  %1259 = vmatpush1.bf16.msra.mxu0 %v624
  %1260 = vmatprep.subr.bf16.mxu0 %v629
  %1261 = vmatpush1.bf16.msra.mxu0 %v628
  %1262 = vmatprep.subr.bf16.mxu0 0
  %1263 = vmatpush1.bf16.msra.mxu0 0
  %1264 = vmatprep.subr.bf16.mxu0 0
  %1265 = vmatpush1.bf16.msra.mxu0 0
  %1266 = vmatprep.subr.bf16.mxu0 0
  %1267 = vmatpush1.bf16.msra.mxu0 0
  %1268 = vmatprep.subr.bf16.mxu0 0
  %1269 = vmatpush1.bf16.msra.mxu0 0
  %1270 = vmatprep.subr.bf16.mxu0 0
  %1271 = vmatpush1.bf16.msra.mxu0 0
  %1272 = vmatprep.subr.bf16.mxu0 0
  %1273 = vmatpush1.bf16.msra.mxu0 0
  %1274 = vmatprep.subr.bf16.mxu0 0
  %1275 = vmatpush1.bf16.msra.mxu0 0
  %1276 = vmatprep.subr.bf16.mxu0 0
  %1277 = vmatpush1.bf16.msra.mxu0 0
  %1278 = vmatprep.mubr.bf16.mxu0 0
  %1279 = vmatmul.mubr.bf16.gmra.mrb[0].mxu0 %v1204
  %v1280 = vpop.f32.mrb[0].mxu0
  %v1281 = vadd.f32 0.0, %v1280
  %v1282 = vpop.f32.mrb[0].mxu0
  %v1283 = vadd.f32 0.0, %v1282
  %v1284 = vpop.f32.mrb[0].mxu0
  %v1285 = vpop.f32.mrb[0].mxu0
  %1286 = vdwg.mxu0
  %v1287 = vadd.f32 %v1200, %v1240
  %v1288 = vadd.f32 %v1201, %v1242
  %v1289 = vadd.f32 %v1202, %v1281
  %v1290 = vadd.f32 %v1203, %v1283
  %v1291 = vxor.u32 %v1287, 2147483648
  %v1292 = vxor.u32 %v1288, 2147483648
  %v1293 = vxor.u32 %v1289, 2147483648
  %v1294 = vmul.f32 %v1291, 1.442695
  %v1295 = vpow.pop %v1294
  %v1296 = vmul.f32 %v1292, 1.442695
  %v1297 = vpow.pop %v1296
  %v1298 = vmul.f32 %v1293, 1.442695
  %v1299 = vpow.pop %v1298
  %v1300 = vadd.f32 %v1295, 1.0
  %v1301 = vadd.f32 %v1297, 1.0
  %v1302 = vadd.f32 %v1299, 1.0
  %v1303 = vrcp.pop %v1300
  %v1304 = vmul.f32 1.0, %v1303
  %v1305 = vrcp.pop %v1301
  %v1306 = vmul.f32 1.0, %v1305
  %v1307 = vrcp.pop %v1302
  %v1308 = vmul.f32 1.0, %v1307
  %v1309 = vtanh.pop %v1290
  %v1310 = vmul.f32 %v1306, %v1196
  %v1311 = vmul.f32 %v1304, %v1309
  %v1312 = vadd.f32 %v1310, %v1311
  %v1313 = vtanh.pop %v1312
  %v1314 = vmul.f32 %v1308, %v1313
  %v1315 = vstv %s1194
  %vm1316 = vcmp.lt.s32.totalorder %v1315, %v458
  %v1317 = vsel %vm1316, 1, 0
  %1318 = vset.pattern.permute.xlu0 0
  %1319 = vperm.xlu0 %1318, %v1317
  %v1320 = vpop.permute.xlu0 %1319
  %vm1321 = vcmp.eq.s32.totalorder %v1320, 1
  %v1322 = vsel %vm1321, %v1314, %v1195
  %1323 = vst [vmem:[#allocation2] sm:$0xff] %v1322
  %v1324 = vsel %vm1321, %v1312, %v1196
  %1325 = vst [vmem:[#allocation3] sm:$0xff] %v1324
  %v1326 = vsel %vm1321, %v1314, 0.0
  %v1327 = vpack.c.bf16 %v1326, %v1326
  %s1328 = scalar_lea.vmem %s6, 16
  %1329 = vst [vmem:[%s1328] sm:$0xf] %v1327
  %s1330 = sadd.s32 %s491, 5
  %v1331 = vld [vmem:[#allocation2] sm:$0xff]
  %v1332 = vld [vmem:[#allocation3] sm:$0xff]
  %s1333 = smul.u32 5, 4
  %s1334 = smul.addr %s1333, 8
  %s1335 = scalar_lea.vmem [#allocation4], %s1334
  %v1336 = vld [vmem:[%s1335] sm:$0xff]
  %v1337 = vld [vmem:[%s1335 + $0x8] sm:$0xff]
  %v1338 = vld [vmem:[%s1335 + $0x10] sm:$0xff]
  %v1339 = vld [vmem:[%s1335 + $0x18] sm:$0xff]
  %v1340 = vpack.c.bf16 %v1331, %v1331
  %1341 = vmatprep.subr.bf16.mxu0 %v599
  %1342 = vmatpush1.bf16.msra.mxu0 %v598
  %1343 = vmatprep.subr.bf16.mxu0 %v603
  %1344 = vmatpush1.bf16.msra.mxu0 %v602
  %1345 = vmatprep.subr.bf16.mxu0 %v607
  %1346 = vmatpush1.bf16.msra.mxu0 %v606
  %1347 = vmatprep.subr.bf16.mxu0 %v611
  %1348 = vmatpush1.bf16.msra.mxu0 %v610
  %1349 = vmatprep.subr.bf16.mxu0 %v615
  %1350 = vmatpush1.bf16.msra.mxu0 %v614
  %1351 = vmatprep.subr.bf16.mxu0 %v619
  %1352 = vmatpush1.bf16.msra.mxu0 %v618
  %1353 = vmatprep.subr.bf16.mxu0 %v623
  %1354 = vmatpush1.bf16.msra.mxu0 %v622
  %1355 = vmatprep.subr.bf16.mxu0 %v627
  %1356 = vmatpush1.bf16.msra.mxu0 %v626
  %1357 = vmatprep.subr.bf16.mxu0 0
  %1358 = vmatpush1.bf16.msra.mxu0 0
  %1359 = vmatprep.subr.bf16.mxu0 0
  %1360 = vmatpush1.bf16.msra.mxu0 0
  %1361 = vmatprep.subr.bf16.mxu0 0
  %1362 = vmatpush1.bf16.msra.mxu0 0
  %1363 = vmatprep.subr.bf16.mxu0 0
  %1364 = vmatpush1.bf16.msra.mxu0 0
  %1365 = vmatprep.subr.bf16.mxu0 0
  %1366 = vmatpush1.bf16.msra.mxu0 0
  %1367 = vmatprep.subr.bf16.mxu0 0
  %1368 = vmatpush1.bf16.msra.mxu0 0
  %1369 = vmatprep.subr.bf16.mxu0 0
  %1370 = vmatpush1.bf16.msra.mxu0 0
  %1371 = vmatprep.subr.bf16.mxu0 0
  %1372 = vmatpush1.bf16.msra.mxu0 0
  %1373 = vmatprep.mubr.bf16.mxu0 0
  %1374 = vmatmul.mubr.bf16.gmra.mrb[0].mxu0 %v1340
  %v1375 = vpop.f32.mrb[0].mxu0
  %v1376 = vadd.f32 0.0, %v1375
  %v1377 = vpop.f32.mrb[0].mxu0
  %v1378 = vadd.f32 0.0, %v1377
  %v1379 = vpop.f32.mrb[0].mxu0
  %v1380 = vpop.f32.mrb[0].mxu0
  %1381 = vdwg.mxu0
  %1382 = vmatprep.subr.bf16.mxu0 %v601
  %1383 = vmatpush1.bf16.msra.mxu0 %v600
  %1384 = vmatprep.subr.bf16.mxu0 %v605
  %1385 = vmatpush1.bf16.msra.mxu0 %v604
  %1386 = vmatprep.subr.bf16.mxu0 %v609
  %1387 = vmatpush1.bf16.msra.mxu0 %v608
  %1388 = vmatprep.subr.bf16.mxu0 %v613
  %1389 = vmatpush1.bf16.msra.mxu0 %v612
  %1390 = vmatprep.subr.bf16.mxu0 %v617
  %1391 = vmatpush1.bf16.msra.mxu0 %v616
  %1392 = vmatprep.subr.bf16.mxu0 %v621
  %1393 = vmatpush1.bf16.msra.mxu0 %v620
  %1394 = vmatprep.subr.bf16.mxu0 %v625
  %1395 = vmatpush1.bf16.msra.mxu0 %v624
  %1396 = vmatprep.subr.bf16.mxu0 %v629
  %1397 = vmatpush1.bf16.msra.mxu0 %v628
  %1398 = vmatprep.subr.bf16.mxu0 0
  %1399 = vmatpush1.bf16.msra.mxu0 0
  %1400 = vmatprep.subr.bf16.mxu0 0
  %1401 = vmatpush1.bf16.msra.mxu0 0
  %1402 = vmatprep.subr.bf16.mxu0 0
  %1403 = vmatpush1.bf16.msra.mxu0 0
  %1404 = vmatprep.subr.bf16.mxu0 0
  %1405 = vmatpush1.bf16.msra.mxu0 0
  %1406 = vmatprep.subr.bf16.mxu0 0
  %1407 = vmatpush1.bf16.msra.mxu0 0
  %1408 = vmatprep.subr.bf16.mxu0 0
  %1409 = vmatpush1.bf16.msra.mxu0 0
  %1410 = vmatprep.subr.bf16.mxu0 0
  %1411 = vmatpush1.bf16.msra.mxu0 0
  %1412 = vmatprep.subr.bf16.mxu0 0
  %1413 = vmatpush1.bf16.msra.mxu0 0
  %1414 = vmatprep.mubr.bf16.mxu0 0
  %1415 = vmatmul.mubr.bf16.gmra.mrb[0].mxu0 %v1340
  %v1416 = vpop.f32.mrb[0].mxu0
  %v1417 = vadd.f32 0.0, %v1416
  %v1418 = vpop.f32.mrb[0].mxu0
  %v1419 = vadd.f32 0.0, %v1418
  %v1420 = vpop.f32.mrb[0].mxu0
  %v1421 = vpop.f32.mrb[0].mxu0
  %1422 = vdwg.mxu0
  %v1423 = vadd.f32 %v1336, %v1376
  %v1424 = vadd.f32 %v1337, %v1378
  %v1425 = vadd.f32 %v1338, %v1417
  %v1426 = vadd.f32 %v1339, %v1419
  %v1427 = vxor.u32 %v1423, 2147483648
  %v1428 = vxor.u32 %v1424, 2147483648
  %v1429 = vxor.u32 %v1425, 2147483648
  %v1430 = vmul.f32 %v1427, 1.442695
  %v1431 = vpow.pop %v1430
  %v1432 = vmul.f32 %v1428, 1.442695
  %v1433 = vpow.pop %v1432
  %v1434 = vmul.f32 %v1429, 1.442695
  %v1435 = vpow.pop %v1434
  %v1436 = vadd.f32 %v1431, 1.0
  %v1437 = vadd.f32 %v1433, 1.0
  %v1438 = vadd.f32 %v1435, 1.0
  %v1439 = vrcp.pop %v1436
  %v1440 = vmul.f32 1.0, %v1439
  %v1441 = vrcp.pop %v1437
  %v1442 = vmul.f32 1.0, %v1441
  %v1443 = vrcp.pop %v1438
  %v1444 = vmul.f32 1.0, %v1443
  %v1445 = vtanh.pop %v1426
  %v1446 = vmul.f32 %v1442, %v1332
  %v1447 = vmul.f32 %v1440, %v1445
  %v1448 = vadd.f32 %v1446, %v1447
  %v1449 = vtanh.pop %v1448
  %v1450 = vmul.f32 %v1444, %v1449
  %v1451 = vstv %s1330
  %vm1452 = vcmp.lt.s32.totalorder %v1451, %v458
  %v1453 = vsel %vm1452, 1, 0
  %1454 = vset.pattern.permute.xlu0 0
  %1455 = vperm.xlu0 %1454, %v1453
  %v1456 = vpop.permute.xlu0 %1455
  %vm1457 = vcmp.eq.s32.totalorder %v1456, 1
  %v1458 = vsel %vm1457, %v1450, %v1331
  %1459 = vst [vmem:[#allocation2] sm:$0xff] %v1458
  %v1460 = vsel %vm1457, %v1448, %v1332
  %1461 = vst [vmem:[#allocation3] sm:$0xff] %v1460
  %v1462 = vsel %vm1457, %v1450, 0.0
  %v1463 = vpack.c.bf16 %v1462, %v1462
  %s1464 = scalar_lea.vmem %s6, 20
  %1465 = vst [vmem:[%s1464] sm:$0xf] %v1463
  %s1466 = sadd.s32 %s491, 6
  %v1467 = vld [vmem:[#allocation2] sm:$0xff]
  %v1468 = vld [vmem:[#allocation3] sm:$0xff]
  %s1469 = smul.u32 6, 4
  %s1470 = smul.addr %s1469, 8
  %s1471 = scalar_lea.vmem [#allocation4], %s1470
  %v1472 = vld [vmem:[%s1471] sm:$0xff]
  %v1473 = vld [vmem:[%s1471 + $0x8] sm:$0xff]
  %v1474 = vld [vmem:[%s1471 + $0x10] sm:$0xff]
  %v1475 = vld [vmem:[%s1471 + $0x18] sm:$0xff]
  %v1476 = vpack.c.bf16 %v1467, %v1467
  %1477 = vmatprep.subr.bf16.mxu0 %v599
  %1478 = vmatpush1.bf16.msra.mxu0 %v598
  %1479 = vmatprep.subr.bf16.mxu0 %v603
  %1480 = vmatpush1.bf16.msra.mxu0 %v602
  %1481 = vmatprep.subr.bf16.mxu0 %v607
  %1482 = vmatpush1.bf16.msra.mxu0 %v606
  %1483 = vmatprep.subr.bf16.mxu0 %v611
  %1484 = vmatpush1.bf16.msra.mxu0 %v610
  %1485 = vmatprep.subr.bf16.mxu0 %v615
  %1486 = vmatpush1.bf16.msra.mxu0 %v614
  %1487 = vmatprep.subr.bf16.mxu0 %v619
  %1488 = vmatpush1.bf16.msra.mxu0 %v618
  %1489 = vmatprep.subr.bf16.mxu0 %v623
  %1490 = vmatpush1.bf16.msra.mxu0 %v622
  %1491 = vmatprep.subr.bf16.mxu0 %v627
  %1492 = vmatpush1.bf16.msra.mxu0 %v626
  %1493 = vmatprep.subr.bf16.mxu0 0
  %1494 = vmatpush1.bf16.msra.mxu0 0
  %1495 = vmatprep.subr.bf16.mxu0 0
  %1496 = vmatpush1.bf16.msra.mxu0 0
  %1497 = vmatprep.subr.bf16.mxu0 0
  %1498 = vmatpush1.bf16.msra.mxu0 0
  %1499 = vmatprep.subr.bf16.mxu0 0
  %1500 = vmatpush1.bf16.msra.mxu0 0
  %1501 = vmatprep.subr.bf16.mxu0 0
  %1502 = vmatpush1.bf16.msra.mxu0 0
  %1503 = vmatprep.subr.bf16.mxu0 0
  %1504 = vmatpush1.bf16.msra.mxu0 0
  %1505 = vmatprep.subr.bf16.mxu0 0
  %1506 = vmatpush1.bf16.msra.mxu0 0
  %1507 = vmatprep.subr.bf16.mxu0 0
  %1508 = vmatpush1.bf16.msra.mxu0 0
  %1509 = vmatprep.mubr.bf16.mxu0 0
  %1510 = vmatmul.mubr.bf16.gmra.mrb[0].mxu0 %v1476
  %v1511 = vpop.f32.mrb[0].mxu0
  %v1512 = vadd.f32 0.0, %v1511
  %v1513 = vpop.f32.mrb[0].mxu0
  %v1514 = vadd.f32 0.0, %v1513
  %v1515 = vpop.f32.mrb[0].mxu0
  %v1516 = vpop.f32.mrb[0].mxu0
  %1517 = vdwg.mxu0
  %1518 = vmatprep.subr.bf16.mxu0 %v601
  %1519 = vmatpush1.bf16.msra.mxu0 %v600
  %1520 = vmatprep.subr.bf16.mxu0 %v605
  %1521 = vmatpush1.bf16.msra.mxu0 %v604
  %1522 = vmatprep.subr.bf16.mxu0 %v609
  %1523 = vmatpush1.bf16.msra.mxu0 %v608
  %1524 = vmatprep.subr.bf16.mxu0 %v613
  %1525 = vmatpush1.bf16.msra.mxu0 %v612
  %1526 = vmatprep.subr.bf16.mxu0 %v617
  %1527 = vmatpush1.bf16.msra.mxu0 %v616
  %1528 = vmatprep.subr.bf16.mxu0 %v621
  %1529 = vmatpush1.bf16.msra.mxu0 %v620
  %1530 = vmatprep.subr.bf16.mxu0 %v625
  %1531 = vmatpush1.bf16.msra.mxu0 %v624
  %1532 = vmatprep.subr.bf16.mxu0 %v629
  %1533 = vmatpush1.bf16.msra.mxu0 %v628
  %1534 = vmatprep.subr.bf16.mxu0 0
  %1535 = vmatpush1.bf16.msra.mxu0 0
  %1536 = vmatprep.subr.bf16.mxu0 0
  %1537 = vmatpush1.bf16.msra.mxu0 0
  %1538 = vmatprep.subr.bf16.mxu0 0
  %1539 = vmatpush1.bf16.msra.mxu0 0
  %1540 = vmatprep.subr.bf16.mxu0 0
  %1541 = vmatpush1.bf16.msra.mxu0 0
  %1542 = vmatprep.subr.bf16.mxu0 0
  %1543 = vmatpush1.bf16.msra.mxu0 0
  %1544 = vmatprep.subr.bf16.mxu0 0
  %1545 = vmatpush1.bf16.msra.mxu0 0
  %1546 = vmatprep.subr.bf16.mxu0 0
  %1547 = vmatpush1.bf16.msra.mxu0 0
  %1548 = vmatprep.subr.bf16.mxu0 0
  %1549 = vmatpush1.bf16.msra.mxu0 0
  %1550 = vmatprep.mubr.bf16.mxu0 0
  %1551 = vmatmul.mubr.bf16.gmra.mrb[0].mxu0 %v1476
  %v1552 = vpop.f32.mrb[0].mxu0
  %v1553 = vadd.f32 0.0, %v1552
  %v1554 = vpop.f32.mrb[0].mxu0
  %v1555 = vadd.f32 0.0, %v1554
  %v1556 = vpop.f32.mrb[0].mxu0
  %v1557 = vpop.f32.mrb[0].mxu0
  %1558 = vdwg.mxu0
  %v1559 = vadd.f32 %v1472, %v1512
  %v1560 = vadd.f32 %v1473, %v1514
  %v1561 = vadd.f32 %v1474, %v1553
  %v1562 = vadd.f32 %v1475, %v1555
  %v1563 = vxor.u32 %v1559, 2147483648
  %v1564 = vxor.u32 %v1560, 2147483648
  %v1565 = vxor.u32 %v1561, 2147483648
  %v1566 = vmul.f32 %v1563, 1.442695
  %v1567 = vpow.pop %v1566
  %v1568 = vmul.f32 %v1564, 1.442695
  %v1569 = vpow.pop %v1568
  %v1570 = vmul.f32 %v1565, 1.442695
  %v1571 = vpow.pop %v1570
  %v1572 = vadd.f32 %v1567, 1.0
  %v1573 = vadd.f32 %v1569, 1.0
  %v1574 = vadd.f32 %v1571, 1.0
  %v1575 = vrcp.pop %v1572
  %v1576 = vmul.f32 1.0, %v1575
  %v1577 = vrcp.pop %v1573
  %v1578 = vmul.f32 1.0, %v1577
  %v1579 = vrcp.pop %v1574
  %v1580 = vmul.f32 1.0, %v1579
  %v1581 = vtanh.pop %v1562
  %v1582 = vmul.f32 %v1578, %v1468
  %v1583 = vmul.f32 %v1576, %v1581
  %v1584 = vadd.f32 %v1582, %v1583
  %v1585 = vtanh.pop %v1584
  %v1586 = vmul.f32 %v1580, %v1585
  %v1587 = vstv %s1466
  %vm1588 = vcmp.lt.s32.totalorder %v1587, %v458
  %v1589 = vsel %vm1588, 1, 0
  %1590 = vset.pattern.permute.xlu0 0
  %1591 = vperm.xlu0 %1590, %v1589
  %v1592 = vpop.permute.xlu0 %1591
  %vm1593 = vcmp.eq.s32.totalorder %v1592, 1
  %v1594 = vsel %vm1593, %v1586, %v1467
  %1595 = vst [vmem:[#allocation2] sm:$0xff] %v1594
  %v1596 = vsel %vm1593, %v1584, %v1468
  %1597 = vst [vmem:[#allocation3] sm:$0xff] %v1596
  %v1598 = vsel %vm1593, %v1586, 0.0
  %v1599 = vpack.c.bf16 %v1598, %v1598
  %s1600 = scalar_lea.vmem %s6, 24
  %1601 = vst [vmem:[%s1600] sm:$0xf] %v1599
  %s1602 = sadd.s32 %s491, 7
  %v1603 = vld [vmem:[#allocation2] sm:$0xff]
  %v1604 = vld [vmem:[#allocation3] sm:$0xff]
  %s1605 = smul.u32 7, 4
  %s1606 = smul.addr %s1605, 8
  %s1607 = scalar_lea.vmem [#allocation4], %s1606
  %v1608 = vld [vmem:[%s1607] sm:$0xff]
  %v1609 = vld [vmem:[%s1607 + $0x8] sm:$0xff]
  %v1610 = vld [vmem:[%s1607 + $0x10] sm:$0xff]
  %v1611 = vld [vmem:[%s1607 + $0x18] sm:$0xff]
  %v1612 = vpack.c.bf16 %v1603, %v1603
  %1613 = vmatprep.subr.bf16.mxu0 %v599
  %1614 = vmatpush1.bf16.msra.mxu0 %v598
  %1615 = vmatprep.subr.bf16.mxu0 %v603
  %1616 = vmatpush1.bf16.msra.mxu0 %v602
  %1617 = vmatprep.subr.bf16.mxu0 %v607
  %1618 = vmatpush1.bf16.msra.mxu0 %v606
  %1619 = vmatprep.subr.bf16.mxu0 %v611
  %1620 = vmatpush1.bf16.msra.mxu0 %v610
  %1621 = vmatprep.subr.bf16.mxu0 %v615
  %1622 = vmatpush1.bf16.msra.mxu0 %v614
  %1623 = vmatprep.subr.bf16.mxu0 %v619
  %1624 = vmatpush1.bf16.msra.mxu0 %v618
  %1625 = vmatprep.subr.bf16.mxu0 %v623
  %1626 = vmatpush1.bf16.msra.mxu0 %v622
  %1627 = vmatprep.subr.bf16.mxu0 %v627
  %1628 = vmatpush1.bf16.msra.mxu0 %v626
  %1629 = vmatprep.subr.bf16.mxu0 0
  %1630 = vmatpush1.bf16.msra.mxu0 0
  %1631 = vmatprep.subr.bf16.mxu0 0
  %1632 = vmatpush1.bf16.msra.mxu0 0
  %1633 = vmatprep.subr.bf16.mxu0 0
  %1634 = vmatpush1.bf16.msra.mxu0 0
  %1635 = vmatprep.subr.bf16.mxu0 0
  %1636 = vmatpush1.bf16.msra.mxu0 0
  %1637 = vmatprep.subr.bf16.mxu0 0
  %1638 = vmatpush1.bf16.msra.mxu0 0
  %1639 = vmatprep.subr.bf16.mxu0 0
  %1640 = vmatpush1.bf16.msra.mxu0 0
  %1641 = vmatprep.subr.bf16.mxu0 0
  %1642 = vmatpush1.bf16.msra.mxu0 0
  %1643 = vmatprep.subr.bf16.mxu0 0
  %1644 = vmatpush1.bf16.msra.mxu0 0
  %1645 = vmatprep.mubr.bf16.mxu0 0
  %1646 = vmatmul.mubr.bf16.gmra.mrb[0].mxu0 %v1612
  %v1647 = vpop.f32.mrb[0].mxu0
  %v1648 = vadd.f32 0.0, %v1647
  %v1649 = vpop.f32.mrb[0].mxu0
  %v1650 = vadd.f32 0.0, %v1649
  %v1651 = vpop.f32.mrb[0].mxu0
  %v1652 = vpop.f32.mrb[0].mxu0
  %1653 = vdwg.mxu0
  %1654 = vmatprep.subr.bf16.mxu0 %v601
  %1655 = vmatpush1.bf16.msra.mxu0 %v600
  %1656 = vmatprep.subr.bf16.mxu0 %v605
  %1657 = vmatpush1.bf16.msra.mxu0 %v604
  %1658 = vmatprep.subr.bf16.mxu0 %v609
  %1659 = vmatpush1.bf16.msra.mxu0 %v608
  %1660 = vmatprep.subr.bf16.mxu0 %v613
  %1661 = vmatpush1.bf16.msra.mxu0 %v612
  %1662 = vmatprep.subr.bf16.mxu0 %v617
  %1663 = vmatpush1.bf16.msra.mxu0 %v616
  %1664 = vmatprep.subr.bf16.mxu0 %v621
  %1665 = vmatpush1.bf16.msra.mxu0 %v620
  %1666 = vmatprep.subr.bf16.mxu0 %v625
  %1667 = vmatpush1.bf16.msra.mxu0 %v624
  %1668 = vmatprep.subr.bf16.mxu0 %v629
  %1669 = vmatpush1.bf16.msra.mxu0 %v628
  %1670 = vmatprep.subr.bf16.mxu0 0
  %1671 = vmatpush1.bf16.msra.mxu0 0
  %1672 = vmatprep.subr.bf16.mxu0 0
  %1673 = vmatpush1.bf16.msra.mxu0 0
  %1674 = vmatprep.subr.bf16.mxu0 0
  %1675 = vmatpush1.bf16.msra.mxu0 0
  %1676 = vmatprep.subr.bf16.mxu0 0
  %1677 = vmatpush1.bf16.msra.mxu0 0
  %1678 = vmatprep.subr.bf16.mxu0 0
  %1679 = vmatpush1.bf16.msra.mxu0 0
  %1680 = vmatprep.subr.bf16.mxu0 0
  %1681 = vmatpush1.bf16.msra.mxu0 0
  %1682 = vmatprep.subr.bf16.mxu0 0
  %1683 = vmatpush1.bf16.msra.mxu0 0
  %1684 = vmatprep.subr.bf16.mxu0 0
  %1685 = vmatpush1.bf16.msra.mxu0 0
  %1686 = vmatprep.mubr.bf16.mxu0 0
  %1687 = vmatmul.mubr.bf16.gmra.mrb[0].mxu0 %v1612
  %v1688 = vpop.f32.mrb[0].mxu0
  %v1689 = vadd.f32 0.0, %v1688
  %v1690 = vpop.f32.mrb[0].mxu0
  %v1691 = vadd.f32 0.0, %v1690
  %v1692 = vpop.f32.mrb[0].mxu0
  %v1693 = vpop.f32.mrb[0].mxu0
  %1694 = vdwg.mxu0
  %v1695 = vadd.f32 %v1608, %v1648
  %v1696 = vadd.f32 %v1609, %v1650
  %v1697 = vadd.f32 %v1610, %v1689
  %v1698 = vadd.f32 %v1611, %v1691
  %v1699 = vxor.u32 %v1695, 2147483648
  %v1700 = vxor.u32 %v1696, 2147483648
  %v1701 = vxor.u32 %v1697, 2147483648
  %v1702 = vmul.f32 %v1699, 1.442695
  %v1703 = vpow.pop %v1702
  %v1704 = vmul.f32 %v1700, 1.442695
  %v1705 = vpow.pop %v1704
  %v1706 = vmul.f32 %v1701, 1.442695
  %v1707 = vpow.pop %v1706
  %v1708 = vadd.f32 %v1703, 1.0
  %v1709 = vadd.f32 %v1705, 1.0
  %v1710 = vadd.f32 %v1707, 1.0
  %v1711 = vrcp.pop %v1708
  %v1712 = vmul.f32 1.0, %v1711
  %v1713 = vrcp.pop %v1709
  %v1714 = vmul.f32 1.0, %v1713
  %v1715 = vrcp.pop %v1710
  %v1716 = vmul.f32 1.0, %v1715
  %v1717 = vtanh.pop %v1698
  %v1718 = vmul.f32 %v1714, %v1604
  %v1719 = vmul.f32 %v1712, %v1717
  %v1720 = vadd.f32 %v1718, %v1719
  %v1721 = vtanh.pop %v1720
  %v1722 = vmul.f32 %v1716, %v1721
  %v1723 = vstv %s1602
  %vm1724 = vcmp.lt.s32.totalorder %v1723, %v458
  %v1725 = vsel %vm1724, 1, 0
  %1726 = vset.pattern.permute.xlu0 0
  %1727 = vperm.xlu0 %1726, %v1725
  %v1728 = vpop.permute.xlu0 %1727
  %vm1729 = vcmp.eq.s32.totalorder %v1728, 1
  %v1730 = vsel %vm1729, %v1722, %v1603
  %1731 = vst [vmem:[#allocation2] sm:$0xff] %v1730
  %v1732 = vsel %vm1729, %v1720, %v1604
  %1733 = vst [vmem:[#allocation3] sm:$0xff] %v1732
  %v1734 = vsel %vm1729, %v1722, 0.0
  %v1735 = vpack.c.bf16 %v1734, %v1734
  %s1736 = scalar_lea.vmem %s6, 28
  %1737 = vst [vmem:[%s1736] sm:$0xf] %v1735
  // Predicated region
  $region30: #{decoder_forward.2} parent=0 // pred_check
    %p1738 = pneg %p27
  $region31: #{decoder_forward.2} parent=0 // pred_check_branch
    %1740 = sbr.rel (%p1738) target = $region33
  $region32: #{decoder_forward.2} parent=0 // pred_region
    %v1741 = vld [vmem:[#allocation2] sm:$0xff]
    %1742 = vst [vmem:[%s7] sm:$0xff] %v1741
    %v1743 = vld [vmem:[#allocation3] sm:$0xff]
    %1744 = vst [vmem:[%s8] sm:$0xff] %v1743
  $region33: #{decoder_forward.2} parent=0 // pred_fallthru
    _
  // Predicated region
  $region34: #{decoder_forward.2} parent=0 // pred_check
    _
  $region35: #{decoder_forward.2} parent=0 // pred_check_branch
    %1746 = sbr.rel (0) target = $region37
  $region36: #{decoder_forward.2} parent=0 // pred_region
    _
  $region37: #{decoder_forward.2} parent=0 // pred_fallthru
    _
  // Predicated region
  $region38: #{decoder_forward.2} parent=0 // pred_check
    _
  $region39: #{decoder_forward.2} parent=0 // pred_check_branch
    %1748 = sbr.rel (0) target = $region41
  $region40: #{decoder_forward.2} parent=0 // pred_region
    _
  $region41: #{decoder_forward.2} parent=0 // pred_fallthru
    _
  // Predicated region
  $region42: #{decoder_forward.2} parent=0 // pred_check
    _
  $region43: #{decoder_forward.2} parent=0 // pred_check_branch
    %1750 = sbr.rel (0) target = $region45
  $region44: #{decoder_forward.2} parent=0 // pred_region
    _
  $region45: #{decoder_forward.2} parent=0 // pred_fallthru
    _
  // Predicated region
  $region46: #{decoder_forward.2} parent=0 // pred_check
    _
  $region47: #{decoder_forward.2} parent=0 // pred_check_branch
    %1752 = sbr.rel (0) target = $region49
  $region48: #{decoder_forward.2} parent=0 // pred_region
    _
  $region49: #{decoder_forward.2} parent=0 // pred_fallthru
    _
  // Predicated region
  $region50: #{decoder_forward.2} parent=0 // pred_check
    _
  $region51: #{decoder_forward.2} parent=0 // pred_check_branch
    %1754 = sbr.rel (0) target = $region53
  $region52: #{decoder_forward.2} parent=0 // pred_region
    _
  $region53: #{decoder_forward.2} parent=0 // pred_fallthru
    _
  // Predicated region
  $region54: #{decoder_forward.2} parent=0 // pred_check
    _
  $region55: #{decoder_forward.2} parent=0 // pred_check_branch
    %1756 = sbr.rel (0) target = $region57
  $region56: #{decoder_forward.2} parent=0 // pred_region
    _
  $region57: #{decoder_forward.2} parent=0 // pred_fallthru
    _

</llo_original>
